<compile_context>
chip_gen: v5e
topology: v5e:2x2
jax: 0.10.0
libtpu: 0.0.40
codegen_flags: <defaults>
</compile_context>

<pallas_src>
import functools

import jax
import jax.numpy as jnp
import numpy as np
from jax.experimental import pallas as pl
from jax.experimental.pallas import tpu as pltpu


def _cdiv(a, b):
    return -(-a // b)


def _wks_matmul_kernel(coefs_ref, evecs_ref, mass_ref, feat_ref, norm_ref,
                       *, v_total, vt, needs_mask):
    # coefs_ref : (1, K, N)    bf16  (same block for every V tile -> resident)
    # evecs_ref : (1, vt, K)   f32   (original evecs streamed once, no pre-cast copy)
    # mass_ref  : (1, 1, vt)   f32   (lane-dense)
    # feat_ref  : (1, vt, N)   bf16  (un-normalized features)
    # norm_ref  : (1, 1, 1, N) f32   (per-tile partial norm, summed in JAX glue)
    ev = evecs_ref[0]                                    # (vt, K) f32
    ev_sq = (ev * ev).astype(jnp.bfloat16)               # square in f32, feed bf16 MXU

    feat = jnp.dot(ev_sq, coefs_ref[0],
                   preferred_element_type=jnp.float32)   # (vt, N) f32
    feat_ref[0] = feat.astype(feat_ref.dtype)

    mass = mass_ref[0]                                    # (1, vt) f32
    feat_sq = feat * feat                                 # (vt, N) f32
    if needs_mask:
        # Last (partial) tile: rows past v_total hold garbage -> mask both the
        # feat^2 rows and the mass lanes out of the reduction.
        base = pl.program_id(1) * vt
        row = jax.lax.broadcasted_iota(jnp.int32, (vt, 1), 0)
        feat_sq = jnp.where(base + row < v_total, feat_sq, 0.0)
        lane = jax.lax.broadcasted_iota(jnp.int32, (1, vt), 1)
        mass = jnp.where(base + lane < v_total, mass, 0.0)

    # Mass-weighted norm as a (1, vt) x (vt, N) dot -> rides the (otherwise idle) MXU.
    norm_ref[0, 0] = jnp.dot(mass, feat_sq, preferred_element_type=jnp.float32)


def _wks_normalize_kernel(feat_ref, norm_ref, out_ref):
    # feat_ref : (1, vt, N) bf16 ; norm_ref : (1, 1, N) f32 ; out_ref : (1, vt, N)
    inv = jax.lax.rsqrt(norm_ref[0] + 1e-12)              # (1, N), EUP
    out_ref[0] = (feat_ref[0].astype(jnp.float32) * inv).astype(out_ref.dtype)


@functools.partial(jax.jit, static_argnames=("n_descr", "subsample_step", "n_eig",
                                             "block_v", "out_dtype"))
def wks_vectorized_forward(evals, evecs, mass, *, n_descr=128, subsample_step=1,
                           n_eig=200, block_v=4096, out_dtype=None):
    """Pallas implementation of WKS_vectorized.forward -> (B, V_sub, n_descr)."""
    dtype = evals.dtype if out_dtype is None else out_dtype
    evals = evals[:, :n_eig]                               # (B, K)
    evecs = evecs[:, :, :n_eig]                            # (B, V, K)
    B, _, K = evecs.shape
    N = n_descr

    # ---- tiny scalar preprocessing (identical math to the torch module) ----
    abs_ev = jnp.sort(jnp.abs(evals), axis=1)              # (B, K)
    e_min = jnp.log(abs_ev[:, 1])
    e_max = jnp.log(abs_ev[:, -1])
    sigma = 7.0 * (e_max - e_min) / n_descr                # (B,)
    e_min = e_min + 2.0 * sigma
    e_max = e_max - 2.0 * sigma
    steps = jnp.linspace(0.0, 1.0, n_descr, dtype=evals.dtype)           # (N,)
    energy = e_min[:, None] * (1.0 - steps) + e_max[:, None] * steps     # (B, N)
    log_ev = jnp.log(jnp.maximum(abs_ev, 1e-12))                         # (B, K)

    # Coefficient table built directly in (K, N) orientation -> (vt,K)x(K,N) MXU dot.
    diff = log_ev[:, :, None] - energy[:, None, :]                       # (B, K, N)
    coefs = jnp.exp(-(diff * diff) / (2.0 * sigma[:, None, None] ** 2))  # (B, K, N)
    inv_scaling = jnp.sum(coefs, axis=1, keepdims=True)                  # (B, 1, N)
    coefs_scaled = (coefs / (inv_scaling + 1e-12)).astype(jnp.bfloat16)  # (B, K, N)

    # ---- subsample V (WKS is per-vertex independent) ----
    evecs_sub = evecs[:, ::subsample_step, :]              # (B, V, K) original dtype
    mass_sub = mass[:, ::subsample_step]                   # (B, V)
    V = evecs_sub.shape[1]
    mass_r = mass_sub[:, None, :].astype(jnp.float32)      # (B, 1, V) lane-dense

    # Vertex tile: full dim if it fits (exempt from the 8/128 rule), else a
    # multiple of 128 so the lane-dense mass block stays legal.  The remainder
    # tile is handled by in-kernel masking -- no padding copies anywhere.
    if V <= block_v:
        vt = V
        needs_mask = False
    else:
        vt = max(128, (block_v // 128) * 128)
        needs_mask = (V % vt) != 0
    n_v = _cdiv(V, vt)

    # ---- pass 1: squared-evecs matmul + mass-weighted partial norms ----
    kern1 = functools.partial(_wks_matmul_kernel,
                              v_total=V, vt=vt, needs_mask=needs_mask)
    feat, part_norm = pl.pallas_call(
        kern1,
        out_shape=(
            jax.ShapeDtypeStruct((B, V, N), jnp.bfloat16),
            jax.ShapeDtypeStruct((B, n_v, 1, N), jnp.float32),
        ),
        grid_spec=pltpu.PrefetchScalarGridSpec(
            num_scalar_prefetch=0,
            grid=(B, n_v),
            in_specs=[
                pl.BlockSpec((1, K, N), lambda b, v: (b, 0, 0)),      # coefs (resident)
                pl.BlockSpec((1, vt, K), lambda b, v: (b, v, 0)),     # evecs tile (f32)
                pl.BlockSpec((1, 1, vt), lambda b, v: (b, 0, v)),     # mass (lane-dense)
            ],
            out_specs=(
                pl.BlockSpec((1, vt, N), lambda b, v: (b, v, 0)),     # feat (unnorm.)
                pl.BlockSpec((1, 1, 1, N), lambda b, v: (b, v, 0, 0)),  # partial norms
            ),
        ),
        compiler_params=pltpu.CompilerParams(
            dimension_semantics=("parallel", "parallel"),
            vmem_limit_bytes=48 * 1024 * 1024,
        ),
    )(coefs_scaled, evecs_sub, mass_r)

    # Tiny cross-tile reduction (B, n_v, 1, N) -> (B, 1, N) in plain JAX.
    feat_norm = jnp.sum(part_norm, axis=1)

    # ---- pass 2: per-descriptor normalization (lane-dense output tiles) ----
    out = pl.pallas_call(
        _wks_normalize_kernel,
        out_shape=jax.ShapeDtypeStruct((B, V, N), dtype),
        grid_spec=pltpu.PrefetchScalarGridSpec(
            num_scalar_prefetch=0,
            grid=(B, n_v),
            in_specs=[
                pl.BlockSpec((1, vt, N), lambda b, v: (b, v, 0)),
                pl.BlockSpec((1, 1, N), lambda b, v: (b, 0, 0)),
            ],
            out_specs=pl.BlockSpec((1, vt, N), lambda b, v: (b, v, 0)),
        ),
        compiler_params=pltpu.CompilerParams(
            dimension_semantics=("parallel", "parallel"),
            vmem_limit_bytes=32 * 1024 * 1024,
        ),
    )(feat, feat_norm)

    return out                                             # (B, V', N)


def wks_reference(evals, evecs, mass, *, n_descr, subsample_step, n_eig):
    """Pure-JAX transcription of the torch module (for validation)."""
    evals = evals[:, :n_eig]
    evecs = evecs[:, :, :n_eig]
    abs_ev = jnp.sort(jnp.abs(evals), axis=1)
    e_min = jnp.log(abs_ev[:, 1])
    e_max = jnp.log(abs_ev[:, -1])
    sigma = 7.0 * (e_max - e_min) / n_descr
    e_min = e_min + 2.0 * sigma
    e_max = e_max - 2.0 * sigma
    steps = jnp.linspace(0.0, 1.0, n_descr, dtype=evals.dtype)
    energy = e_min[:, None] * (1.0 - steps) + e_max[:, None] * steps
    coefs = jnp.exp(
        -(energy[..., None] - jnp.log(jnp.maximum(abs_ev, 1e-12))[:, None, :]) ** 2
        / (2.0 * sigma[:, None, None] ** 2))                          # (B, N, K)
    wks = jnp.einsum("bnk,bvk->bnv", coefs, evecs ** 2)               # (B, N, V)
    wks = wks / (coefs.sum(-1)[..., None] + 1e-12)
    feat = wks[:, :, ::subsample_step]
    mass_sub = mass[:, ::subsample_step]
    feat_norm = jnp.einsum("bnv,bv->bn", feat ** 2, mass_sub)
    feat = feat / jnp.sqrt(feat_norm[..., None] + 1e-12)
    return jnp.transpose(feat, (0, 2, 1))


if __name__ == "__main__":
    # Small, module-consistent shapes.  V=300 with block_v=128 exercises the
    # multi-tile path AND the partial last tile (remainder 44) whose norm
    # contribution is masked in-kernel (no padding anywhere).
    B, V, K_total = 2, 300, 32
    N_DESCR, N_EIG = 128, 200   # n_eig > K_total -> slice is a no-op

    key = jax.random.PRNGKey(0)
    k1, k2, k3 = jax.random.split(key, 3)
    # Positive, well-separated "eigenvalues" so log()s are finite.
    evals = jax.random.uniform(k1, (B, K_total), jnp.float32, 0.05, 10.0)
    evecs = jax.random.normal(k2, (B, V, K_total), jnp.float32)
    mass = jax.random.uniform(k3, (B, V), jnp.float32, 0.1, 2.0)

    # Config 1: multiple V tiles (vt=128 -> 3 tiles, last partial) + per-tile
    # partial-norm reduction path.
    out = wks_vectorized_forward(
        evals, evecs, mass,
        n_descr=N_DESCR, subsample_step=1, n_eig=N_EIG, block_v=128)
    out = jax.block_until_ready(out)
    ref = wks_reference(evals, evecs, mass,
                        n_descr=N_DESCR, subsample_step=1, n_eig=N_EIG)
    assert out.shape == (B, V, N_DESCR), out.shape
    np.testing.assert_allclose(np.asarray(out, np.float32), np.asarray(ref),
                               rtol=2e-2, atol=2e-3)

    # Config 2: vertex subsampling, default tile size (single full-dim tile).
    out2 = wks_vectorized_forward(
        evals, evecs, mass,
        n_descr=N_DESCR, subsample_step=2, n_eig=N_EIG)
    out2 = jax.block_until_ready(out2)
    ref2 = wks_reference(evals, evecs, mass,
                         n_descr=N_DESCR, subsample_step=2, n_eig=N_EIG)
    assert out2.shape == (B, V // 2, N_DESCR), out2.shape
    np.testing.assert_allclose(np.asarray(out2, np.float32), np.asarray(ref2),
                               rtol=2e-2, atol=2e-3)

    print("KERNEL_OK")
</pallas_src>

<mosaic_0001>
module attributes {stable_mosaic.version = 11 : i64} {
  func.func @_wks_normalize_kernel(%arg0: i32, %arg1: i32, %arg2: memref<1x128x128xbf16, #tpu.memory_space<vmem>>, %arg3: memref<1x1x128xf32, #tpu.memory_space<vmem>>, %arg4: memref<1x128x128xf32, #tpu.memory_space<vmem>>) attributes {dimension_semantics = [#tpu.dimension_semantics<parallel>, #tpu.dimension_semantics<parallel>], iteration_bounds = array<i64: 2, 3>, scalar_prefetch = 0 : i64, scratch_operands = 0 : i64, tpu.core_type = #tpu.core_type<tc>, window_params = [{transform_indices = @transform_0, window_bounds = array<i64: 1, 128, 128>}, {transform_indices = @transform_1, window_bounds = array<i64: 1, 1, 128>}, {transform_indices = @transform_2, window_bounds = array<i64: 1, 128, 128>}]} {
    %c0 = arith.constant 0 : index
    %c0_0 = arith.constant 0 : index
    %c0_1 = arith.constant 0 : index
    %0 = vector.load %arg3[%c0, %c0_0, %c0_1] : memref<1x1x128xf32, #tpu.memory_space<vmem>>, vector<1x1x128xf32>
    %1 = vector.shape_cast %0 : vector<1x1x128xf32> to vector<1x128xf32>
    %cst = arith.constant 9.99999996E-13 : f32
    %2 = vector.broadcast %cst : f32 to vector<1x128xf32>
    %3 = arith.addf %1, %2 : vector<1x128xf32>
    %4 = math.rsqrt %3 : vector<1x128xf32>
    %c0_2 = arith.constant 0 : index
    %c0_3 = arith.constant 0 : index
    %c0_4 = arith.constant 0 : index
    %5 = vector.load %arg2[%c0_2, %c0_3, %c0_4] : memref<1x128x128xbf16, #tpu.memory_space<vmem>>, vector<1x128x128xbf16>
    %6 = vector.shape_cast %5 : vector<1x128x128xbf16> to vector<128x128xbf16>
    %7 = arith.extf %6 : vector<128x128xbf16> to vector<128x128xf32>
    %8 = vector.broadcast %4 : vector<1x128xf32> to vector<128x128xf32>
    %9 = arith.mulf %7, %8 : vector<128x128xf32>
    %c0_5 = arith.constant 0 : index
    %c0_6 = arith.constant 0 : index
    %c0_7 = arith.constant 0 : index
    %10 = vector.load %arg4[%c0_5, %c0_6, %c0_7] : memref<1x128x128xf32, #tpu.memory_space<vmem>>, vector<1x128x128xf32>
    %11 = vector.shape_cast %10 : vector<1x128x128xf32> to vector<128x128xf32>
    %12 = vector.shape_cast %9 : vector<128x128xf32> to vector<1x128x128xf32>
    tpu.vector_store %arg4[%c0_5, %c0_6, %c0_7], %12 {strides = array<i32>} : memref<1x128x128xf32, #tpu.memory_space<vmem>>, vector<1x128x128xf32>,
    return
  }
  func.func @transform_0(%arg0: i32, %arg1: i32) -> (i32, i32, i32) {
    %c0_i32 = arith.constant 0 : i32
    %c0_i32_0 = arith.constant 0 : i32
    return %arg0, %arg1, %c0_i32 : i32, i32, i32
  }
  func.func @transform_1(%arg0: i32, %arg1: i32) -> (i32, i32, i32) {
    %c0_i32 = arith.constant 0 : i32
    %c0_i32_0 = arith.constant 0 : i32
    %c0_i32_1 = arith.constant 0 : i32
    return %arg0, %c0_i32, %c0_i32_0 : i32, i32, i32
  }
  func.func @transform_2(%arg0: i32, %arg1: i32) -> (i32, i32, i32) {
    %c0_i32 = arith.constant 0 : i32
    %c0_i32_0 = arith.constant 0 : i32
    return %arg0, %arg1, %c0_i32 : i32, i32, i32
  }
}

module attributes {stable_mosaic.version = 11 : i64} {
  func.func @_wks_matmul_kernel(%arg0: i32, %arg1: i32, %arg2: memref<1x32x128xbf16, #tpu.memory_space<vmem>>, %arg3: memref<1x128x32xf32, #tpu.memory_space<vmem>>, %arg4: memref<1x1x128xf32, #tpu.memory_space<vmem>>, %arg5: memref<1x128x128xbf16, #tpu.memory_space<vmem>>, %arg6: memref<1x1x1x128xf32, #tpu.memory_space<vmem>>) attributes {dimension_semantics = [#tpu.dimension_semantics<parallel>, #tpu.dimension_semantics<parallel>], iteration_bounds = array<i64: 2, 3>, scalar_prefetch = 0 : i64, scratch_operands = 0 : i64, tpu.core_type = #tpu.core_type<tc>, window_params = [{transform_indices = @transform_0, window_bounds = array<i64: 1, 32, 128>}, {transform_indices = @transform_1, window_bounds = array<i64: 1, 128, 32>}, {transform_indices = @transform_2, window_bounds = array<i64: 1, 1, 128>}, {transform_indices = @transform_3, window_bounds = array<i64: 1, 128, 128>}, {transform_indices = @transform_4, window_bounds = array<i64: 1, 1, 1, 128>}]} {
    %c0 = arith.constant 0 : index
    %c0_0 = arith.constant 0 : index
    %c0_1 = arith.constant 0 : index
    %0 = vector.load %arg3[%c0, %c0_0, %c0_1] : memref<1x128x32xf32, #tpu.memory_space<vmem>>, vector<1x128x32xf32>
    %1 = vector.shape_cast %0 : vector<1x128x32xf32> to vector<128x32xf32>
    %2 = arith.mulf %1, %1 : vector<128x32xf32>
    %3 = arith.truncf %2 : vector<128x32xf32> to vector<128x32xbf16>
    %c0_2 = arith.constant 0 : index
    %c0_3 = arith.constant 0 : index
    %c0_4 = arith.constant 0 : index
    %4 = vector.load %arg2[%c0_2, %c0_3, %c0_4] : memref<1x32x128xbf16, #tpu.memory_space<vmem>>, vector<1x32x128xbf16>
    %5 = vector.shape_cast %4 : vector<1x32x128xbf16> to vector<32x128xbf16>
    %cst = arith.constant dense<0.000000e+00> : vector<128x128xf32>
    %6 = tpu.matmul %3, %5, %cst {dimension_numbers = #tpu.dot_dimension_numbers<[1], [0], [0], [1], [0, 0, 1, 1], [], []>} : vector<128x32xbf16>, vector<32x128xbf16>, vector<128x128xf32> -> vector<128x128xf32>
    %7 = arith.truncf %6 : vector<128x128xf32> to vector<128x128xbf16>
    %c0_5 = arith.constant 0 : index
    %c0_6 = arith.constant 0 : index
    %c0_7 = arith.constant 0 : index
    %8 = vector.load %arg5[%c0_5, %c0_6, %c0_7] : memref<1x128x128xbf16, #tpu.memory_space<vmem>>, vector<1x128x128xbf16>
    %9 = vector.shape_cast %8 : vector<1x128x128xbf16> to vector<128x128xbf16>
    %10 = vector.shape_cast %7 : vector<128x128xbf16> to vector<1x128x128xbf16>
    tpu.vector_store %arg5[%c0_5, %c0_6, %c0_7], %10 {strides = array<i32>} : memref<1x128x128xbf16, #tpu.memory_space<vmem>>, vector<1x128x128xbf16>,
    %c0_8 = arith.constant 0 : index
    %c0_9 = arith.constant 0 : index
    %c0_10 = arith.constant 0 : index
    %11 = vector.load %arg4[%c0_8, %c0_9, %c0_10] : memref<1x1x128xf32, #tpu.memory_space<vmem>>, vector<1x1x128xf32>
    %12 = vector.shape_cast %11 : vector<1x1x128xf32> to vector<1x128xf32>
    %13 = arith.mulf %6, %6 : vector<128x128xf32>
    %c128_i32 = arith.constant 128 : i32
    %14 = arith.muli %arg1, %c128_i32 : i32
    %15 = tpu.iota {dimensions = array<i32: 0>} : vector<128x1xi32>
    %16 = vector.broadcast %14 : i32 to vector<128x1xi32>
    %17 = arith.addi %16, %15 : vector<128x1xi32>
    %c300_i32 = arith.constant 300 : i32
    %18 = vector.broadcast %c300_i32 : i32 to vector<128x1xi32>
    %19 = arith.cmpi slt, %17, %18 : vector<128x1xi32>
    %cst_11 = arith.constant 0.000000e+00 : f32
    %20 = vector.shape_cast %19 : vector<128x1xi1> to vector<128x1xi1>
    %21 = vector.broadcast %20 : vector<128x1xi1> to vector<128x128xi1>
    %22 = vector.broadcast %cst_11 : f32 to vector<128x128xf32>
    %23 = arith.select %21, %13, %22 : vector<128x128xi1>, vector<128x128xf32>
    %24 = tpu.iota {dimensions = array<i32: 1>} : vector<1x128xi32>
    %25 = vector.broadcast %14 : i32 to vector<1x128xi32>
    %26 = arith.addi %25, %24 : vector<1x128xi32>
    %c300_i32_12 = arith.constant 300 : i32
    %27 = vector.broadcast %c300_i32_12 : i32 to vector<1x128xi32>
    %28 = arith.cmpi slt, %26, %27 : vector<1x128xi32>
    %cst_13 = arith.constant 0.000000e+00 : f32
    %29 = vector.broadcast %cst_13 : f32 to vector<1x128xf32>
    %30 = arith.select %28, %12, %29 : vector<1x128xi1>, vector<1x128xf32>
    %cst_14 = arith.constant dense<0.000000e+00> : vector<1x128xf32>
    %31 = tpu.matmul %30, %23, %cst_14 {dimension_numbers = #tpu.dot_dimension_numbers<[1], [0], [0], [1], [0, 0, 1, 1], [], []>} : vector<1x128xf32>, vector<128x128xf32>, vector<1x128xf32> -> vector<1x128xf32>
    %c0_15 = arith.constant 0 : index
    %c0_16 = arith.constant 0 : index
    %c0_17 = arith.constant 0 : index
    %c0_18 = arith.constant 0 : index
    %32 = vector.load %arg6[%c0_15, %c0_16, %c0_17, %c0_18] : memref<1x1x1x128xf32, #tpu.memory_space<vmem>>, vector<1x1x1x128xf32>
    %33 = vector.shape_cast %32 : vector<1x1x1x128xf32> to vector<1x128xf32>
    %34 = vector.shape_cast %31 : vector<1x128xf32> to vector<1x1x1x128xf32>
    tpu.vector_store %arg6[%c0_15, %c0_16, %c0_17, %c0_18], %34 {strides = array<i32>} : memref<1x1x1x128xf32, #tpu.memory_space<vmem>>, vector<1x1x1x128xf32>,
    return
  }
  func.func @transform_0(%arg0: i32, %arg1: i32) -> (i32, i32, i32) {
    %c0_i32 = arith.constant 0 : i32
    %c0_i32_0 = arith.constant 0 : i32
    %c0_i32_1 = arith.constant 0 : i32
    return %arg0, %c0_i32, %c0_i32_0 : i32, i32, i32
  }
  func.func @transform_1(%arg0: i32, %arg1: i32) -> (i32, i32, i32) {
    %c0_i32 = arith.constant 0 : i32
    %c0_i32_0 = arith.constant 0 : i32
    return %arg0, %arg1, %c0_i32 : i32, i32, i32
  }
  func.func @transform_2(%arg0: i32, %arg1: i32) -> (i32, i32, i32) {
    %c0_i32 = arith.constant 0 : i32
    %c0_i32_0 = arith.constant 0 : i32
    return %arg0, %c0_i32, %arg1 : i32, i32, i32
  }
  func.func @transform_3(%arg0: i32, %arg1: i32) -> (i32, i32, i32) {
    %c0_i32 = arith.constant 0 : i32
    %c0_i32_0 = arith.constant 0 : i32
    return %arg0, %arg1, %c0_i32 : i32, i32, i32
  }
  func.func @transform_4(%arg0: i32, %arg1: i32) -> (i32, i32, i32, i32) {
    %c0_i32 = arith.constant 0 : i32
    %c0_i32_0 = arith.constant 0 : i32
    %c0_i32_1 = arith.constant 0 : i32
    return %arg0, %arg1, %c0_i32, %c0_i32_0 : i32, i32, i32, i32
  }
}

</mosaic_0001>

<llo_original>
// kernel: wks_vectorized_forward.3
$region0: #{wks_vectorized_forward.3}
  #allocation0 [shape = 'u32[]', space=smem, size = 0x4, offset = 0x4, fixed_abs, tag = 'smem constant byte address 0x4 - core index']
  #allocation1 [shape = 'u32[72,128]{1,0:T(1,128)}', space=vmem, size = 0x9000, scoped, tag = 'internal scratch']
  %s0 = inlined_call_operand.vmem [shape: bf16[2,300,128], index: 0, kind: input, shape index: {}]
  %s1 = inlined_call_operand.vmem [shape: f32[2,1,128], index: 1, kind: input, shape index: {}]
  %s2 = inlined_call_operand.vmem [shape: f32[2,300,128], index: 2, kind: output, shape index: {}]
  %s3 = sld [smem:[#allocation0]]
  $region89: #{wks_vectorized_forward.3} parent=0
    _
  %s5 = ssub.s32 1, %s3
  %s6 = scalar_select 0, %s5, %s3
  $region1: #{wks_vectorized_forward.3} parent=0
    #allocation2 [shape = 'u8[131072]{0}', space=vmem, size = 0x20000, scoped, tag = 'output window, operand 0']
    loop: start=0, step=1, limit=8
    $region2: #{wks_vectorized_forward.3} parent=1 // loop_pre_header
      _
    $region3: #{wks_vectorized_forward.3} parent=1 // loop_header
      %s8 = sphi 0, %s12
      %p9 = scmp.ge.s32.totalorder %s8, 8
      %s15 = sphi 0, %s27
      %s16 = sphi 0, %s23
      %s17 = sphi 0, %s15
      %s18 = sphi 0, %s16
      %s19 = sphi 0, %s17
      %s20 = sphi 0, %s18
      %s32 = sphi 0, %s34
      %s35 = sphi 0, %s32
      %s36 = sphi 0, %s35
      %s52 = sphi 0, %s36
      %s58 = sphi 0, %s60
      %s61 = sphi 0, %s58
      %s62 = sphi 0, %s61
      %s78 = sphi 0, %s62
      %s86 = sphi 0, %s88
      %s89 = sphi 0, %s86
      %s90 = sphi 0, %s89
      %s106 = sphi 0, %s90
    $region4: #{wks_vectorized_forward.3} parent=1 // loop_header_branch
      %11 = sbr.rel (%p9) target = $region8
    $region5: #{wks_vectorized_forward.3} parent=1 // loop_body
      %s13 = ssub.s32 %s8, 1
      %s14 = ssub.s32 %s8, 2
      %s21 = sadd.s32 1, %s16
      %p22 = scmp.ge.s32.totalorder %s21, 3
      %s23 = scalar_select %p22, 0, %s21
      %s24 = sadd.s32 1, %s15
      %s25 = scalar_select %p22, %s24, %s15
      %p26 = scmp.ge.s32.totalorder %s25, 2
      %s27 = scalar_select %p26, 0, %s25
      %s28 = ssub.s32 %s15, %s27
      %s29 = ssub.s32 %s16, %s23
      %s30 = sor.u32 %s28, %s29
      %p31 = scmp.eq.s32.totalorder %s30, 0
      %s33 = sadd.s32 %s32, 1
      %s34 = scalar_select %p31, %s32, %s33
      %p37 = pneg %p31
      %p38 = scmp.eq.s32.totalorder %s8, 5
      %p39 = por %p37, %p38
      %p40 = scmp.ne.s32.totalorder %s32, %s35
      %p41 = scmp.eq.s32.totalorder %s8, 0
      %p42 = por %p40, %p41
      %p43 = scmp.ne.s32.totalorder %s32, %s35
      %p44 = scmp.eq.s32.totalorder %s13, 5
      %p45 = por %p43, %p44
      %p46 = scmp.ne.s32.totalorder %s35, %s36
      %p47 = scmp.eq.s32.totalorder %s13, 0
      %p48 = por %p46, %p47
      %p49 = scmp.ne.s32.totalorder %s35, %s36
      %p50 = scmp.eq.s32.totalorder %s14, 5
      %p51 = por %p49, %p50
      %p53 = scmp.ne.s32.totalorder %s36, %s52
      %p54 = scmp.eq.s32.totalorder %s14, 0
      %p55 = por %p53, %p54
      %s56 = ssub.s32 %s15, %s27
      %p57 = scmp.eq.s32.totalorder %s56, 0
      %s59 = sadd.s32 %s58, 1
      %s60 = scalar_select %p57, %s58, %s59
      %p63 = pneg %p57
      %p64 = scmp.eq.s32.totalorder %s8, 5
      %p65 = por %p63, %p64
      %p66 = scmp.ne.s32.totalorder %s58, %s61
      %p67 = scmp.eq.s32.totalorder %s8, 0
      %p68 = por %p66, %p67
      %p69 = scmp.ne.s32.totalorder %s58, %s61
      %p70 = scmp.eq.s32.totalorder %s13, 5
      %p71 = por %p69, %p70
      %p72 = scmp.ne.s32.totalorder %s61, %s62
      %p73 = scmp.eq.s32.totalorder %s13, 0
      %p74 = por %p72, %p73
      %p75 = scmp.ne.s32.totalorder %s61, %s62
      %p76 = scmp.eq.s32.totalorder %s14, 5
      %p77 = por %p75, %p76
      %p79 = scmp.ne.s32.totalorder %s62, %s78
      %p80 = scmp.eq.s32.totalorder %s14, 0
      %p81 = por %p79, %p80
      %s82 = ssub.s32 %s15, %s27
      %s83 = ssub.s32 %s16, %s23
      %s84 = sor.u32 %s82, %s83
      %p85 = scmp.eq.s32.totalorder %s84, 0
      %s87 = sadd.s32 %s86, 1
      %s88 = scalar_select %p85, %s86, %s87
      %p91 = pneg %p85
      %p92 = scmp.eq.s32.totalorder %s8, 5
      %p93 = por %p91, %p92
      %p94 = scmp.ne.s32.totalorder %s86, %s89
      %p95 = scmp.eq.s32.totalorder %s8, 0
      %p96 = por %p94, %p95
      %p97 = scmp.ne.s32.totalorder %s86, %s89
      %p98 = scmp.eq.s32.totalorder %s13, 5
      %p99 = por %p97, %p98
      %p100 = scmp.ne.s32.totalorder %s89, %s90
      %p101 = scmp.eq.s32.totalorder %s13, 0
      %p102 = por %p100, %p101
      %p103 = scmp.ne.s32.totalorder %s89, %s90
      %p104 = scmp.eq.s32.totalorder %s14, 5
      %p105 = por %p103, %p104
      %p107 = scmp.ne.s32.totalorder %s90, %s106
      %p108 = scmp.eq.s32.totalorder %s14, 0
      %p109 = por %p107, %p108
      %p110 = scmp.le.s32.totalorder 1, %s8
      %p111 = scmp.lt.s32.totalorder %s8, 7
      %p112 = pnand %p110, %p111
      %p113 = pneg %p112
      // Predicated region
      $region9: #{wks_vectorized_forward.3} parent=5 // pred_check
        _
      $region10: #{wks_vectorized_forward.3} parent=5 // pred_check_branch
        %115 = sbr.rel (%p112) target = $region12
      $region11: #{wks_vectorized_forward.3} parent=5 // pred_region
        %s116 = ssub.s32 %s8, 1
      $region12: #{wks_vectorized_forward.3} parent=5 // pred_fallthru
        _
      %p117 = scmp.lt.s32.totalorder %s8, 6
      // Predicated region
      $region13: #{wks_vectorized_forward.3} parent=5 // pred_check
        %p118 = pneg %p117
      $region14: #{wks_vectorized_forward.3} parent=5 // pred_check_branch
        %120 = sbr.rel (%p118) target = $region16
      $region15: #{wks_vectorized_forward.3} parent=5 // pred_region
        // Predicated region
        $region17: #{wks_vectorized_forward.3} parent=15 // pred_check
          %p121 = pneg %p42
        $region18: #{wks_vectorized_forward.3} parent=15 // pred_check_branch
          %123 = sbr.rel (%p121) target = $region20
        $region19: #{wks_vectorized_forward.3} parent=15 // pred_region
          %s124 = smul.u32 16, %s16
          %s125 = ssub.s32 38, %s124
          %p126 = scmp.lt.s32.totalorder %s125, 16
          %s127 = scalar_select %p126, %s125, 16
          %s128 = smul.u32 4, %s127
          %p129 = scmp.lt.s32.totalorder %s15, 1
          %s130 = scalar_select %p129, %s15, 1
          %p131 = scmp.lt.s32.totalorder %s124, 37
          %s132 = scalar_select %p131, %s124, 37
          %s133 = smul.addr %s130, 38
          %s134 = sadd.s32 %s132, %s133
          %s135 = smul.addr %s134, 4
          %s136 = scalar_lea.vmem %s0, %s135
          %s137 = smul.u32 16, %s16
          %s138 = ssub.s32 38, %s137
          %p139 = scmp.lt.s32.totalorder %s138, 16
          %s140 = scalar_select %p139, %s138, 16
          %s141 = smul.u32 4, %s140
        $region20: #{wks_vectorized_forward.3} parent=15 // pred_fallthru
          _
        // Predicated region
        $region21: #{wks_vectorized_forward.3} parent=15 // pred_check
          %p142 = pneg %p68
        $region22: #{wks_vectorized_forward.3} parent=15 // pred_check_branch
          %144 = sbr.rel (%p142) target = $region24
        $region23: #{wks_vectorized_forward.3} parent=15 // pred_region
          %p145 = scmp.lt.s32.totalorder %s15, 1
          %s146 = scalar_select %p145, %s15, 1
          %s147 = scalar_lea.vmem %s1, %s146
        $region24: #{wks_vectorized_forward.3} parent=15 // pred_fallthru
          _
      $region16: #{wks_vectorized_forward.3} parent=5 // pred_fallthru
        _
      %p148 = scmp.le.s32.totalorder 1, %s8
      %p149 = scmp.lt.s32.totalorder %s8, 7
      %p150 = pnand %p148, %p149
      %p151 = pneg %p150
      // Predicated region
      $region25: #{wks_vectorized_forward.3} parent=5 // pred_check
        _
      $region26: #{wks_vectorized_forward.3} parent=5 // pred_check_branch
        %153 = sbr.rel (%p150) target = $region28
      $region27: #{wks_vectorized_forward.3} parent=5 // pred_region
        %s154 = ssub.s32 %s8, 1
        %s155 = smul.u32 16, %s18
        %s156 = ssub.s32 38, %s155
        %p157 = scmp.lt.s32.totalorder %s156, 16
        %s158 = scalar_select %p157, %s156, 16
        %s159 = smul.u32 4, %s158
        %p160 = scmp.lt.s32.totalorder %s17, 1
        %s161 = scalar_select %p160, %s17, 1
        %p162 = scmp.lt.s32.totalorder %s155, 37
        %s163 = scalar_select %p162, %s155, 37
        %s164 = smul.addr %s161, 38
        %s165 = sadd.s32 %s163, %s164
        %s166 = smul.addr %s165, 4
        %s167 = scalar_lea.vmem %s0, %s166
        %p168 = pneg %p48
        %p169 = pneg %p45
        %p170 = scmp.lt.s32.totalorder %s17, 1
        %s171 = scalar_select %p170, %s17, 1
        %s172 = scalar_lea.vmem %s1, %s171
        %p173 = pneg %p74
        %p174 = pneg %p71
        %p175 = pneg %p102
        %p176 = pneg %p99
        %s177 = sand.u32 %s89, 1
        %s178 = sand.u32 %s89, 1
        %s179 = smul.addr %s178, 128
        %s180 = scalar_lea.vmem [#allocation2], %s179
        %s181 = smul.u32 16, %s18
        %s182 = ssub.s32 38, %s181
        %p183 = scmp.lt.s32.totalorder %s182, 16
        %s184 = scalar_select %p183, %s182, 16
        %s185 = smul.u32 4, %s184
        %p186 = scmp.lt.s32.totalorder %s17, 1
        %s187 = scalar_select %p186, %s17, 1
        %p188 = scmp.lt.s32.totalorder %s181, 37
        %s189 = scalar_select %p188, %s181, 37
        %s190 = smul.addr %s187, 38
        %s191 = sadd.s32 %s189, %s190
        %s192 = smul.addr %s191, 4
        %s193 = scalar_lea.vmem %s0, %s192
        %s194 = smul.u32 16, %s18
        %s195 = ssub.s32 38, %s194
        %p196 = scmp.lt.s32.totalorder %s195, 16
        %s197 = scalar_select %p196, %s195, 16
        %s198 = smul.u32 4, %s197
        %p199 = scmp.lt.s32.totalorder %s17, 1
        %s200 = scalar_select %p199, %s17, 1
        %s201 = scalar_lea.vmem %s1, %s200
        %s202 = smul.u32 16, %s18
        %s203 = ssub.s32 38, %s202
        %p204 = scmp.lt.s32.totalorder %s203, 16
        %s205 = scalar_select %p204, %s203, 16
        %s206 = smul.u32 8, %s205
        %v207 = vld [vmem:[%s201] sm:$0x1]
        %v208 = vadd.f32 %v207, 1e-12
        %v209 = vrsqrt.pop %v208
        %v210 = vmul.f32 %v209, %v208
        %v211 = vmul.f32 %v210, %v209
        %v212 = vmul.f32 0.5, %v211
        %v213 = vsub.f32 1.5, %v212
        %v214 = vmul.f32 %v209, %v213
        %vm215 = vweird.f32 %v208
        %vm216 = vweird.f32 %v209
        %vm217 = vmor %vm215, %vm216
        %v218 = vsel %vm217, %v209, %v214
        %v219 = vld [vmem:[%s193] sm:$0xf]
        %v220 = vld [vmem:[%s193 + $0x4] sm:$0xf]
        %v221 = vld [vmem:[%s193 + $0x8] sm:$0xf]
        %v222 = vld [vmem:[%s193 + $0xc] sm:$0xf]
        %v223 = vld [vmem:[%s193 + $0x10] sm:$0xf]
        %v224 = vld [vmem:[%s193 + $0x14] sm:$0xf]
        %v225 = vld [vmem:[%s193 + $0x18] sm:$0xf]
        %v226 = vld [vmem:[%s193 + $0x1c] sm:$0xf]
        %v227 = vld [vmem:[%s193 + $0x20] sm:$0xf]
        %v228 = vld [vmem:[%s193 + $0x24] sm:$0xf]
        %v229 = vld [vmem:[%s193 + $0x28] sm:$0xf]
        %v230 = vld [vmem:[%s193 + $0x2c] sm:$0xf]
        %v231 = vld [vmem:[%s193 + $0x30] sm:$0xf]
        %v232 = vld [vmem:[%s193 + $0x34] sm:$0xf]
        %v233 = vld [vmem:[%s193 + $0x38] sm:$0xf]
        %v234 = vld [vmem:[%s193 + $0x3c] sm:$0xf]
        %v235 = vunpack.c.l.bf16 %v219
        %v236 = vunpack.c.l.bf16 %v220
        %v237 = vunpack.c.l.bf16 %v221
        %v238 = vunpack.c.l.bf16 %v222
        %v239 = vunpack.c.l.bf16 %v223
        %v240 = vunpack.c.l.bf16 %v224
        %v241 = vunpack.c.l.bf16 %v225
        %v242 = vunpack.c.l.bf16 %v226
        %v243 = vunpack.c.l.bf16 %v227
        %v244 = vunpack.c.l.bf16 %v228
        %v245 = vunpack.c.l.bf16 %v229
        %v246 = vunpack.c.l.bf16 %v230
        %v247 = vunpack.c.l.bf16 %v231
        %v248 = vunpack.c.l.bf16 %v232
        %v249 = vunpack.c.l.bf16 %v233
        %v250 = vunpack.c.l.bf16 %v234
        %v252 = vperm.slane %v218, 0
        %v254 = vmul.f32 %v235, %v252
        %v255 = vmul.f32 %v236, %v252
        %v256 = vmul.f32 %v237, %v252
        %v257 = vmul.f32 %v238, %v252
        %v258 = vmul.f32 %v239, %v252
        %v259 = vmul.f32 %v240, %v252
        %v260 = vmul.f32 %v241, %v252
        %v261 = vmul.f32 %v242, %v252
        %v262 = vmul.f32 %v243, %v252
        %v263 = vmul.f32 %v244, %v252
        %v264 = vmul.f32 %v245, %v252
        %v265 = vmul.f32 %v246, %v252
        %v266 = vmul.f32 %v247, %v252
        %v267 = vmul.f32 %v248, %v252
        %v268 = vmul.f32 %v249, %v252
        %v269 = vmul.f32 %v250, %v252
        %270 = vst [vmem:[%s180] sm:$0xff] %v254
        %271 = vst [vmem:[%s180 + $0x8] sm:$0xff] %v255
        %272 = vst [vmem:[%s180 + $0x10] sm:$0xff] %v256
        %273 = vst [vmem:[%s180 + $0x18] sm:$0xff] %v257
        %274 = vst [vmem:[%s180 + $0x20] sm:$0xff] %v258
        %275 = vst [vmem:[%s180 + $0x28] sm:$0xff] %v259
        %276 = vst [vmem:[%s180 + $0x30] sm:$0xff] %v260
        %277 = vst [vmem:[%s180 + $0x38] sm:$0xff] %v261
        %278 = vst [vmem:[%s180 + $0x40] sm:$0xff] %v262
        %279 = vst [vmem:[%s180 + $0x48] sm:$0xff] %v263
        %280 = vst [vmem:[%s180 + $0x50] sm:$0xff] %v264
        %281 = vst [vmem:[%s180 + $0x58] sm:$0xff] %v265
        %282 = vst [vmem:[%s180 + $0x60] sm:$0xff] %v266
        %283 = vst [vmem:[%s180 + $0x68] sm:$0xff] %v267
        %284 = vst [vmem:[%s180 + $0x70] sm:$0xff] %v268
        %285 = vst [vmem:[%s180 + $0x78] sm:$0xff] %v269
        %s286 = sand.u32 %s89, 1
        %s287 = sand.u32 %s89, 1
        %s288 = smul.addr %s287, 128
        %s289 = scalar_lea.vmem [#allocation2], %s288
        // Predicated region
        $region29: #{wks_vectorized_forward.3} parent=27 // pred_check
          %p290 = pneg %p99
        $region30: #{wks_vectorized_forward.3} parent=27 // pred_check_branch
          %292 = sbr.rel (%p290) target = $region32
        $region31: #{wks_vectorized_forward.3} parent=27 // pred_region
          %s293 = smul.u32 16, %s18
          %s294 = ssub.s32 38, %s293
          %p295 = scmp.lt.s32.totalorder %s294, 16
          %s296 = scalar_select %p295, %s294, 16
          %s297 = smul.u32 8, %s296
          %p298 = scmp.ne.s32.totalorder 0, %s297
          %s299 = smul.addr %s17, 38
          %s300 = sadd.s32 %s293, %s299
          %s301 = smul.addr %s300, 8
          %s302 = scalar_lea.vmem %s2, %s301
          // Predicated region
          $region33: #{wks_vectorized_forward.3} parent=31 // pred_check
            %p303 = pneg %p298
          $region34: #{wks_vectorized_forward.3} parent=31 // pred_check_branch
            %305 = sbr.rel (%p303) target = $region36
          $region35: #{wks_vectorized_forward.3} parent=31 // pred_region
            // Predicated region
            $region37: #{wks_vectorized_forward.3} parent=35 // pred_check
              _
            $region38: #{wks_vectorized_forward.3} parent=35 // pred_check_branch
              %307 = sbr.rel (0) target = $region40
            $region39: #{wks_vectorized_forward.3} parent=35 // pred_region
              // Predicated region
              $region59: #{wks_vectorized_forward.3} parent=39 // pred_check
                _
              $region60: #{wks_vectorized_forward.3} parent=39 // pred_check_branch
                %387 = sbr.rel (0) target = $region62
              $region61: #{wks_vectorized_forward.3} parent=39 // pred_region
                %s388 = sshrl.u32 %s296, 4
                // While loop
                $region63: #{wks_vectorized_forward.3} parent=61 // loop_pre_header
                  _
                $region64: #{wks_vectorized_forward.3} parent=61 // loop_header
                  %s390 = sphi 0, %s392
                  %p391 = scmp.ge.s32.totalorder %s390, %s388
                  %s395 = sphi 0, %s432
                  %s396 = sphi %s289, %s435
                  %s397 = sphi %s302, %s436
                $region65: #{wks_vectorized_forward.3} parent=61 // loop_header_branch
                  %394 = sbr.rel (%p391) target = $region69
                $region66: #{wks_vectorized_forward.3} parent=61 // loop_body
                  %v398 = vld [vmem:[%s396] sm:$0xff]
                  %399 = vst [vmem:[%s397] sm:$0xff] %v398
                  %v400 = vld [vmem:[%s396 + $0x8] sm:$0xff]
                  %401 = vst [vmem:[%s397 + $0x8] sm:$0xff] %v400
                  %v402 = vld [vmem:[%s396 + $0x10] sm:$0xff]
                  %403 = vst [vmem:[%s397 + $0x10] sm:$0xff] %v402
                  %v404 = vld [vmem:[%s396 + $0x18] sm:$0xff]
                  %405 = vst [vmem:[%s397 + $0x18] sm:$0xff] %v404
                  %v406 = vld [vmem:[%s396 + $0x20] sm:$0xff]
                  %407 = vst [vmem:[%s397 + $0x20] sm:$0xff] %v406
                  %v408 = vld [vmem:[%s396 + $0x28] sm:$0xff]
                  %409 = vst [vmem:[%s397 + $0x28] sm:$0xff] %v408
                  %v410 = vld [vmem:[%s396 + $0x30] sm:$0xff]
                  %411 = vst [vmem:[%s397 + $0x30] sm:$0xff] %v410
                  %v412 = vld [vmem:[%s396 + $0x38] sm:$0xff]
                  %413 = vst [vmem:[%s397 + $0x38] sm:$0xff] %v412
                  %v414 = vld [vmem:[%s396 + $0x40] sm:$0xff]
                  %415 = vst [vmem:[%s397 + $0x40] sm:$0xff] %v414
                  %v416 = vld [vmem:[%s396 + $0x48] sm:$0xff]
                  %417 = vst [vmem:[%s397 + $0x48] sm:$0xff] %v416
                  %v418 = vld [vmem:[%s396 + $0x50] sm:$0xff]
                  %419 = vst [vmem:[%s397 + $0x50] sm:$0xff] %v418
                  %v420 = vld [vmem:[%s396 + $0x58] sm:$0xff]
                  %421 = vst [vmem:[%s397 + $0x58] sm:$0xff] %v420
                  %v422 = vld [vmem:[%s396 + $0x60] sm:$0xff]
                  %423 = vst [vmem:[%s397 + $0x60] sm:$0xff] %v422
                  %v424 = vld [vmem:[%s396 + $0x68] sm:$0xff]
                  %425 = vst [vmem:[%s397 + $0x68] sm:$0xff] %v424
                  %v426 = vld [vmem:[%s396 + $0x70] sm:$0xff]
                  %427 = vst [vmem:[%s397 + $0x70] sm:$0xff] %v426
                  %v428 = vld [vmem:[%s396 + $0x78] sm:$0xff]
                  %429 = vst [vmem:[%s397 + $0x78] sm:$0xff] %v428
                  %s430 = sadd.s32 1, %s395
                  %p431 = scmp.ge.s32.totalorder %s430, %s388
                  %s432 = scalar_select %p431, 0, %s430
                  %s433 = smul.u32 %s432, 128
                  %s434 = smul.u32 %s432, 128
                  %s435 = scalar_lea.vmem %s289, %s433 [#allocation2]
                  %s436 = scalar_lea.vmem %s302, %s434
                $region67: #{wks_vectorized_forward.3} parent=61 // loop_footer
                  %s392 = sadd.s32 %s390, 1
                $region68: #{wks_vectorized_forward.3} parent=61 // loop_footer_branch
                  %389 = sbr.rel target = $region64
                $region69: #{wks_vectorized_forward.3} parent=61 // loop_exit
                  _
                %s437 = sshrl.u32 %s296, 4
                %s438 = sand.u32 %s296, 15
                %s439 = smul.u32 %s437, 16
                %s440 = smul.u32 8, %s439
                %s441 = scalar_lea.vmem %s289, %s440 [#allocation2]
                %s442 = smul.u32 8, %s439
                %s443 = scalar_lea.vmem %s302, %s442
                // While loop
                $region70: #{wks_vectorized_forward.3} parent=61 // loop_pre_header
                  _
                $region71: #{wks_vectorized_forward.3} parent=61 // loop_header
                  %s445 = sphi 0, %s447
                  %p446 = scmp.ge.s32.totalorder %s445, %s438
                  %s450 = sphi 0, %s457
                  %s451 = sphi %s441, %s460
                  %s452 = sphi %s443, %s461
                $region72: #{wks_vectorized_forward.3} parent=61 // loop_header_branch
                  %449 = sbr.rel (%p446) target = $region76
                $region73: #{wks_vectorized_forward.3} parent=61 // loop_body
                  %v453 = vld [vmem:[%s451] sm:$0xff]
                  %454 = vst [vmem:[%s452] sm:$0xff] %v453
                  %s455 = sadd.s32 1, %s450
                  %p456 = scmp.ge.s32.totalorder %s455, %s438
                  %s457 = scalar_select %p456, 0, %s455
                  %s458 = smul.u32 %s457, 8
                  %s459 = smul.u32 %s457, 8
                  %s460 = scalar_lea.vmem %s441, %s458 [#allocation2]
                  %s461 = scalar_lea.vmem %s443, %s459
                $region74: #{wks_vectorized_forward.3} parent=61 // loop_footer
                  %s447 = sadd.s32 %s445, 1
                $region75: #{wks_vectorized_forward.3} parent=61 // loop_footer_branch
                  %444 = sbr.rel target = $region71
                $region76: #{wks_vectorized_forward.3} parent=61 // loop_exit
                  _
              $region62: #{wks_vectorized_forward.3} parent=39 // pred_fallthru
                _
              // Predicated region
              $region77: #{wks_vectorized_forward.3} parent=39 // pred_check
                _
              $region78: #{wks_vectorized_forward.3} parent=39 // pred_check_branch
                %463 = sbr.rel target = $region80
              $region79: #{wks_vectorized_forward.3} parent=39 // pred_region
                _
              $region80: #{wks_vectorized_forward.3} parent=39 // pred_fallthru
                _
            $region40: #{wks_vectorized_forward.3} parent=35 // pred_fallthru
              _
            // Predicated region
            $region41: #{wks_vectorized_forward.3} parent=35 // pred_check
              _
            $region42: #{wks_vectorized_forward.3} parent=35 // pred_check_branch
              %309 = sbr.rel target = $region44
            $region43: #{wks_vectorized_forward.3} parent=35 // pred_region
              %s311 = ssub.s32 256, 1
              %s312 = sshrl.u32 %s296, 4
              // While loop
              $region45: #{wks_vectorized_forward.3} parent=43 // loop_pre_header
                _
              $region46: #{wks_vectorized_forward.3} parent=43 // loop_header
                %s314 = sphi 0, %s316
                %p315 = scmp.ge.s32.totalorder %s314, %s312
                %s319 = sphi 0, %s356
                %s320 = sphi %s289, %s359
                %s321 = sphi %s302, %s360
              $region47: #{wks_vectorized_forward.3} parent=43 // loop_header_branch
                %318 = sbr.rel (%p315) target = $region51
              $region48: #{wks_vectorized_forward.3} parent=43 // loop_body
                %v322 = vld [vmem:[%s320] sm:%s311]
                %323 = vst [vmem:[%s321] sm:%s311] %v322
                %v324 = vld [vmem:[%s320 + $0x8] sm:%s311]
                %325 = vst [vmem:[%s321 + $0x8] sm:%s311] %v324
                %v326 = vld [vmem:[%s320 + $0x10] sm:%s311]
                %327 = vst [vmem:[%s321 + $0x10] sm:%s311] %v326
                %v328 = vld [vmem:[%s320 + $0x18] sm:%s311]
                %329 = vst [vmem:[%s321 + $0x18] sm:%s311] %v328
                %v330 = vld [vmem:[%s320 + $0x20] sm:%s311]
                %331 = vst [vmem:[%s321 + $0x20] sm:%s311] %v330
                %v332 = vld [vmem:[%s320 + $0x28] sm:%s311]
                %333 = vst [vmem:[%s321 + $0x28] sm:%s311] %v332
                %v334 = vld [vmem:[%s320 + $0x30] sm:%s311]
                %335 = vst [vmem:[%s321 + $0x30] sm:%s311] %v334
                %v336 = vld [vmem:[%s320 + $0x38] sm:%s311]
                %337 = vst [vmem:[%s321 + $0x38] sm:%s311] %v336
                %v338 = vld [vmem:[%s320 + $0x40] sm:%s311]
                %339 = vst [vmem:[%s321 + $0x40] sm:%s311] %v338
                %v340 = vld [vmem:[%s320 + $0x48] sm:%s311]
                %341 = vst [vmem:[%s321 + $0x48] sm:%s311] %v340
                %v342 = vld [vmem:[%s320 + $0x50] sm:%s311]
                %343 = vst [vmem:[%s321 + $0x50] sm:%s311] %v342
                %v344 = vld [vmem:[%s320 + $0x58] sm:%s311]
                %345 = vst [vmem:[%s321 + $0x58] sm:%s311] %v344
                %v346 = vld [vmem:[%s320 + $0x60] sm:%s311]
                %347 = vst [vmem:[%s321 + $0x60] sm:%s311] %v346
                %v348 = vld [vmem:[%s320 + $0x68] sm:%s311]
                %349 = vst [vmem:[%s321 + $0x68] sm:%s311] %v348
                %v350 = vld [vmem:[%s320 + $0x70] sm:%s311]
                %351 = vst [vmem:[%s321 + $0x70] sm:%s311] %v350
                %v352 = vld [vmem:[%s320 + $0x78] sm:%s311]
                %353 = vst [vmem:[%s321 + $0x78] sm:%s311] %v352
                %s354 = sadd.s32 1, %s319
                %p355 = scmp.ge.s32.totalorder %s354, %s312
                %s356 = scalar_select %p355, 0, %s354
                %s357 = smul.u32 %s356, 128
                %s358 = smul.u32 %s356, 128
                %s359 = scalar_lea.vmem %s289, %s357 [#allocation2]
                %s360 = scalar_lea.vmem %s302, %s358
              $region49: #{wks_vectorized_forward.3} parent=43 // loop_footer
                %s316 = sadd.s32 %s314, 1
              $region50: #{wks_vectorized_forward.3} parent=43 // loop_footer_branch
                %313 = sbr.rel target = $region46
              $region51: #{wks_vectorized_forward.3} parent=43 // loop_exit
                _
              %s361 = sshrl.u32 %s296, 4
              %s362 = sand.u32 %s296, 15
              %s363 = smul.u32 %s361, 16
              %s364 = smul.u32 8, %s363
              %s365 = scalar_lea.vmem %s289, %s364 [#allocation2]
              %s366 = smul.u32 8, %s363
              %s367 = scalar_lea.vmem %s302, %s366
              // While loop
              $region52: #{wks_vectorized_forward.3} parent=43 // loop_pre_header
                _
              $region53: #{wks_vectorized_forward.3} parent=43 // loop_header
                %s369 = sphi 0, %s371
                %p370 = scmp.ge.s32.totalorder %s369, %s362
                %s374 = sphi 0, %s381
                %s375 = sphi %s365, %s384
                %s376 = sphi %s367, %s385
              $region54: #{wks_vectorized_forward.3} parent=43 // loop_header_branch
                %373 = sbr.rel (%p370) target = $region58
              $region55: #{wks_vectorized_forward.3} parent=43 // loop_body
                %v377 = vld [vmem:[%s375] sm:%s311]
                %378 = vst [vmem:[%s376] sm:%s311] %v377
                %s379 = sadd.s32 1, %s374
                %p380 = scmp.ge.s32.totalorder %s379, %s362
                %s381 = scalar_select %p380, 0, %s379
                %s382 = smul.u32 %s381, 8
                %s383 = smul.u32 %s381, 8
                %s384 = scalar_lea.vmem %s365, %s382 [#allocation2]
                %s385 = scalar_lea.vmem %s367, %s383
              $region56: #{wks_vectorized_forward.3} parent=43 // loop_footer
                %s371 = sadd.s32 %s369, 1
              $region57: #{wks_vectorized_forward.3} parent=43 // loop_footer_branch
                %368 = sbr.rel target = $region53
              $region58: #{wks_vectorized_forward.3} parent=43 // loop_exit
                _
            $region44: #{wks_vectorized_forward.3} parent=35 // pred_fallthru
              _
          $region36: #{wks_vectorized_forward.3} parent=31 // pred_fallthru
            _
          %464 = vnop
        $region32: #{wks_vectorized_forward.3} parent=27 // pred_fallthru
          _
      $region28: #{wks_vectorized_forward.3} parent=5 // pred_fallthru
        _
      %p465 = scmp.le.s32.totalorder 2, %s8
      // Predicated region
      $region81: #{wks_vectorized_forward.3} parent=5 // pred_check
        %p466 = pneg %p465
      $region82: #{wks_vectorized_forward.3} parent=5 // pred_check_branch
        %468 = sbr.rel (%p466) target = $region84
      $region83: #{wks_vectorized_forward.3} parent=5 // pred_region
        %s469 = ssub.s32 %s8, 2
        // Predicated region
        $region85: #{wks_vectorized_forward.3} parent=83 // pred_check
          %p470 = pneg %p105
        $region86: #{wks_vectorized_forward.3} parent=83 // pred_check_branch
          %472 = sbr.rel (%p470) target = $region88
        $region87: #{wks_vectorized_forward.3} parent=83 // pred_region
          %s473 = sand.u32 %s90, 1
          %s474 = sand.u32 %s90, 1
          %s475 = smul.addr %s474, 128
          %s476 = scalar_lea.vmem [#allocation2], %s475
        $region88: #{wks_vectorized_forward.3} parent=83 // pred_fallthru
          _
      $region84: #{wks_vectorized_forward.3} parent=5 // pred_fallthru
        _
    $region6: #{wks_vectorized_forward.3} parent=1 // loop_footer
      %s12 = sadd.s32 1, %s8
    $region7: #{wks_vectorized_forward.3} parent=1 // loop_footer_branch
      %7 = sbr.rel target = $region3
    $region8: #{wks_vectorized_forward.3} parent=1 // loop_exit
      _

// kernel: wks_vectorized_forward.2
$region0: #{wks_vectorized_forward.2}
  #allocation0 [shape = 'u32[]', space=smem, size = 0x4, offset = 0x4, fixed_abs, tag = 'smem constant byte address 0x4 - core index']
  #allocation1 [shape = 'u32[72,128]{1,0:T(1,128)}', space=vmem, size = 0x9000, scoped, tag = 'internal scratch']
  %s0 = inlined_call_operand.vmem [shape: bf16[2,32,128], index: 0, kind: input, shape index: {}]
  %s1 = inlined_call_operand.vmem [shape: f32[2,300,32], index: 1, kind: input, shape index: {}]
  %s2 = inlined_call_operand.vmem [shape: f32[2,1,300], index: 2, kind: input, shape index: {}]
  %s3 = inlined_call_operand.vmem [shape: bf16[2,300,128], index: 3, kind: output, shape index: {0}]
  %s4 = inlined_call_operand.vmem [shape: f32[2,3,1,128], index: 4, kind: output, shape index: {1}]
  %5 = xla_tuple %s3, %s4
  %s6 = sld [smem:[#allocation0]]
  $region97: #{wks_vectorized_forward.2} parent=0
    _
  %s8 = ssub.s32 1, %s6
  %s9 = scalar_select 0, %s8, %s6
  $region1: #{wks_vectorized_forward.2} parent=0
    #allocation2 [shape = 'u8[65536]{0}', space=vmem, size = 0x10000, scoped, tag = 'output window, operand 0']
    loop: start=0, step=1, limit=8
    $region2: #{wks_vectorized_forward.2} parent=1 // loop_pre_header
      _
    $region3: #{wks_vectorized_forward.2} parent=1 // loop_header
      %s11 = sphi 0, %s15
      %p12 = scmp.ge.s32.totalorder %s11, 8
      %s18 = sphi 0, %s30
      %s19 = sphi 0, %s26
      %s20 = sphi 0, %s18
      %s21 = sphi 0, %s19
      %s22 = sphi 0, %s20
      %s23 = sphi 0, %s21
      %s33 = sphi 0, %s35
      %s36 = sphi 0, %s33
      %s37 = sphi 0, %s36
      %s53 = sphi 0, %s37
      %s61 = sphi 0, %s63
      %s64 = sphi 0, %s61
      %s65 = sphi 0, %s64
      %s81 = sphi 0, %s65
      %s89 = sphi 0, %s91
      %s92 = sphi 0, %s89
      %s93 = sphi 0, %s92
      %s109 = sphi 0, %s93
      %s117 = sphi 0, %s119
      %s120 = sphi 0, %s117
      %s121 = sphi 0, %s120
      %s137 = sphi 0, %s121
      %s145 = sphi 0, %s147
      %s148 = sphi 0, %s145
      %s149 = sphi 0, %s148
      %s165 = sphi 0, %s149
    $region4: #{wks_vectorized_forward.2} parent=1 // loop_header_branch
      %14 = sbr.rel (%p12) target = $region8
    $region5: #{wks_vectorized_forward.2} parent=1 // loop_body
      %s16 = ssub.s32 %s11, 1
      %s17 = ssub.s32 %s11, 2
      %s24 = sadd.s32 1, %s19
      %p25 = scmp.ge.s32.totalorder %s24, 3
      %s26 = scalar_select %p25, 0, %s24
      %s27 = sadd.s32 1, %s18
      %s28 = scalar_select %p25, %s27, %s18
      %p29 = scmp.ge.s32.totalorder %s28, 2
      %s30 = scalar_select %p29, 0, %s28
      %s31 = ssub.s32 %s18, %s30
      %p32 = scmp.eq.s32.totalorder %s31, 0
      %s34 = sadd.s32 %s33, 1
      %s35 = scalar_select %p32, %s33, %s34
      %p38 = pneg %p32
      %p39 = scmp.eq.s32.totalorder %s11, 5
      %p40 = por %p38, %p39
      %p41 = scmp.ne.s32.totalorder %s33, %s36
      %p42 = scmp.eq.s32.totalorder %s11, 0
      %p43 = por %p41, %p42
      %p44 = scmp.ne.s32.totalorder %s33, %s36
      %p45 = scmp.eq.s32.totalorder %s16, 5
      %p46 = por %p44, %p45
      %p47 = scmp.ne.s32.totalorder %s36, %s37
      %p48 = scmp.eq.s32.totalorder %s16, 0
      %p49 = por %p47, %p48
      %p50 = scmp.ne.s32.totalorder %s36, %s37
      %p51 = scmp.eq.s32.totalorder %s17, 5
      %p52 = por %p50, %p51
      %p54 = scmp.ne.s32.totalorder %s37, %s53
      %p55 = scmp.eq.s32.totalorder %s17, 0
      %p56 = por %p54, %p55
      %s57 = ssub.s32 %s18, %s30
      %s58 = ssub.s32 %s19, %s26
      %s59 = sor.u32 %s57, %s58
      %p60 = scmp.eq.s32.totalorder %s59, 0
      %s62 = sadd.s32 %s61, 1
      %s63 = scalar_select %p60, %s61, %s62
      %p66 = pneg %p60
      %p67 = scmp.eq.s32.totalorder %s11, 5
      %p68 = por %p66, %p67
      %p69 = scmp.ne.s32.totalorder %s61, %s64
      %p70 = scmp.eq.s32.totalorder %s11, 0
      %p71 = por %p69, %p70
      %p72 = scmp.ne.s32.totalorder %s61, %s64
      %p73 = scmp.eq.s32.totalorder %s16, 5
      %p74 = por %p72, %p73
      %p75 = scmp.ne.s32.totalorder %s64, %s65
      %p76 = scmp.eq.s32.totalorder %s16, 0
      %p77 = por %p75, %p76
      %p78 = scmp.ne.s32.totalorder %s64, %s65
      %p79 = scmp.eq.s32.totalorder %s17, 5
      %p80 = por %p78, %p79
      %p82 = scmp.ne.s32.totalorder %s65, %s81
      %p83 = scmp.eq.s32.totalorder %s17, 0
      %p84 = por %p82, %p83
      %s85 = ssub.s32 %s18, %s30
      %s86 = ssub.s32 %s19, %s26
      %s87 = sor.u32 %s85, %s86
      %p88 = scmp.eq.s32.totalorder %s87, 0
      %s90 = sadd.s32 %s89, 1
      %s91 = scalar_select %p88, %s89, %s90
      %p94 = pneg %p88
      %p95 = scmp.eq.s32.totalorder %s11, 5
      %p96 = por %p94, %p95
      %p97 = scmp.ne.s32.totalorder %s89, %s92
      %p98 = scmp.eq.s32.totalorder %s11, 0
      %p99 = por %p97, %p98
      %p100 = scmp.ne.s32.totalorder %s89, %s92
      %p101 = scmp.eq.s32.totalorder %s16, 5
      %p102 = por %p100, %p101
      %p103 = scmp.ne.s32.totalorder %s92, %s93
      %p104 = scmp.eq.s32.totalorder %s16, 0
      %p105 = por %p103, %p104
      %p106 = scmp.ne.s32.totalorder %s92, %s93
      %p107 = scmp.eq.s32.totalorder %s17, 5
      %p108 = por %p106, %p107
      %p110 = scmp.ne.s32.totalorder %s93, %s109
      %p111 = scmp.eq.s32.totalorder %s17, 0
      %p112 = por %p110, %p111
      %s113 = ssub.s32 %s18, %s30
      %s114 = ssub.s32 %s19, %s26
      %s115 = sor.u32 %s113, %s114
      %p116 = scmp.eq.s32.totalorder %s115, 0
      %s118 = sadd.s32 %s117, 1
      %s119 = scalar_select %p116, %s117, %s118
      %p122 = pneg %p116
      %p123 = scmp.eq.s32.totalorder %s11, 5
      %p124 = por %p122, %p123
      %p125 = scmp.ne.s32.totalorder %s117, %s120
      %p126 = scmp.eq.s32.totalorder %s11, 0
      %p127 = por %p125, %p126
      %p128 = scmp.ne.s32.totalorder %s117, %s120
      %p129 = scmp.eq.s32.totalorder %s16, 5
      %p130 = por %p128, %p129
      %p131 = scmp.ne.s32.totalorder %s120, %s121
      %p132 = scmp.eq.s32.totalorder %s16, 0
      %p133 = por %p131, %p132
      %p134 = scmp.ne.s32.totalorder %s120, %s121
      %p135 = scmp.eq.s32.totalorder %s17, 5
      %p136 = por %p134, %p135
      %p138 = scmp.ne.s32.totalorder %s121, %s137
      %p139 = scmp.eq.s32.totalorder %s17, 0
      %p140 = por %p138, %p139
      %s141 = ssub.s32 %s18, %s30
      %s142 = ssub.s32 %s19, %s26
      %s143 = sor.u32 %s141, %s142
      %p144 = scmp.eq.s32.totalorder %s143, 0
      %s146 = sadd.s32 %s145, 1
      %s147 = scalar_select %p144, %s145, %s146
      %p150 = pneg %p144
      %p151 = scmp.eq.s32.totalorder %s11, 5
      %p152 = por %p150, %p151
      %p153 = scmp.ne.s32.totalorder %s145, %s148
      %p154 = scmp.eq.s32.totalorder %s11, 0
      %p155 = por %p153, %p154
      %p156 = scmp.ne.s32.totalorder %s145, %s148
      %p157 = scmp.eq.s32.totalorder %s16, 5
      %p158 = por %p156, %p157
      %p159 = scmp.ne.s32.totalorder %s148, %s149
      %p160 = scmp.eq.s32.totalorder %s16, 0
      %p161 = por %p159, %p160
      %p162 = scmp.ne.s32.totalorder %s148, %s149
      %p163 = scmp.eq.s32.totalorder %s17, 5
      %p164 = por %p162, %p163
      %p166 = scmp.ne.s32.totalorder %s149, %s165
      %p167 = scmp.eq.s32.totalorder %s17, 0
      %p168 = por %p166, %p167
      %p169 = scmp.le.s32.totalorder 1, %s11
      %p170 = scmp.lt.s32.totalorder %s11, 7
      %p171 = pnand %p169, %p170
      %p172 = pneg %p171
      // Predicated region
      $region9: #{wks_vectorized_forward.2} parent=5 // pred_check
        _
      $region10: #{wks_vectorized_forward.2} parent=5 // pred_check_branch
        %174 = sbr.rel (%p171) target = $region12
      $region11: #{wks_vectorized_forward.2} parent=5 // pred_region
        %s175 = ssub.s32 %s11, 1
      $region12: #{wks_vectorized_forward.2} parent=5 // pred_fallthru
        _
      %p176 = scmp.lt.s32.totalorder %s11, 6
      // Predicated region
      $region13: #{wks_vectorized_forward.2} parent=5 // pred_check
        %p177 = pneg %p176
      $region14: #{wks_vectorized_forward.2} parent=5 // pred_check_branch
        %179 = sbr.rel (%p177) target = $region16
      $region15: #{wks_vectorized_forward.2} parent=5 // pred_region
        // Predicated region
        $region17: #{wks_vectorized_forward.2} parent=15 // pred_check
          %p180 = pneg %p43
        $region18: #{wks_vectorized_forward.2} parent=15 // pred_check_branch
          %182 = sbr.rel (%p180) target = $region20
        $region19: #{wks_vectorized_forward.2} parent=15 // pred_region
          %p183 = scmp.lt.s32.totalorder %s18, 1
          %s184 = scalar_select %p183, %s18, 1
          %s185 = smul.addr %s184, 4
          %s186 = smul.addr %s185, 4
          %s187 = scalar_lea.vmem %s0, %s186
        $region20: #{wks_vectorized_forward.2} parent=15 // pred_fallthru
          _
        // Predicated region
        $region21: #{wks_vectorized_forward.2} parent=15 // pred_check
          %p188 = pneg %p71
        $region22: #{wks_vectorized_forward.2} parent=15 // pred_check_branch
          %190 = sbr.rel (%p188) target = $region24
        $region23: #{wks_vectorized_forward.2} parent=15 // pred_region
          %s191 = smul.u32 16, %s19
          %s192 = ssub.s32 38, %s191
          %p193 = scmp.lt.s32.totalorder %s192, 16
          %s194 = scalar_select %p193, %s192, 16
          %s195 = smul.u32 8, %s194
          %p196 = scmp.lt.s32.totalorder %s18, 1
          %s197 = scalar_select %p196, %s18, 1
          %p198 = scmp.lt.s32.totalorder %s191, 37
          %s199 = scalar_select %p198, %s191, 37
          %s200 = smul.addr %s197, 38
          %s201 = sadd.s32 %s199, %s200
          %s202 = smul.addr %s201, 8
          %s203 = scalar_lea.vmem %s1, %s202
          %s204 = smul.u32 16, %s19
          %s205 = ssub.s32 38, %s204
          %p206 = scmp.lt.s32.totalorder %s205, 16
          %s207 = scalar_select %p206, %s205, 16
          %s208 = smul.u32 8, %s207
        $region24: #{wks_vectorized_forward.2} parent=15 // pred_fallthru
          _
        // Predicated region
        $region25: #{wks_vectorized_forward.2} parent=15 // pred_check
          %p209 = pneg %p99
        $region26: #{wks_vectorized_forward.2} parent=15 // pred_check_branch
          %211 = sbr.rel (%p209) target = $region28
        $region27: #{wks_vectorized_forward.2} parent=15 // pred_region
          %p212 = scmp.lt.s32.totalorder %s18, 1
          %s213 = scalar_select %p212, %s18, 1
          %p214 = scmp.lt.s32.totalorder %s19, 2
          %s215 = scalar_select %p214, %s19, 2
          %s216 = smul.addr %s213, 3
          %s217 = sadd.s32 %s215, %s216
          %s218 = scalar_lea.vmem %s2, %s217
        $region28: #{wks_vectorized_forward.2} parent=15 // pred_fallthru
          _
      $region16: #{wks_vectorized_forward.2} parent=5 // pred_fallthru
        _
      %p219 = scmp.le.s32.totalorder 1, %s11
      %p220 = scmp.lt.s32.totalorder %s11, 7
      %p221 = pnand %p219, %p220
      %p222 = pneg %p221
      // Predicated region
      $region29: #{wks_vectorized_forward.2} parent=5 // pred_check
        _
      $region30: #{wks_vectorized_forward.2} parent=5 // pred_check_branch
        %224 = sbr.rel (%p221) target = $region32
      $region31: #{wks_vectorized_forward.2} parent=5 // pred_region
        %s225 = ssub.s32 %s11, 1
        %p226 = scmp.lt.s32.totalorder %s20, 1
        %s227 = scalar_select %p226, %s20, 1
        %s228 = smul.addr %s227, 4
        %s229 = smul.addr %s228, 4
        %s230 = scalar_lea.vmem %s0, %s229
        %p231 = pneg %p49
        %p232 = pneg %p46
        %s233 = smul.u32 16, %s21
        %s234 = ssub.s32 38, %s233
        %p235 = scmp.lt.s32.totalorder %s234, 16
        %s236 = scalar_select %p235, %s234, 16
        %s237 = smul.u32 8, %s236
        %p238 = scmp.lt.s32.totalorder %s20, 1
        %s239 = scalar_select %p238, %s20, 1
        %p240 = scmp.lt.s32.totalorder %s233, 37
        %s241 = scalar_select %p240, %s233, 37
        %s242 = smul.addr %s239, 38
        %s243 = sadd.s32 %s241, %s242
        %s244 = smul.addr %s243, 8
        %s245 = scalar_lea.vmem %s1, %s244
        %p246 = pneg %p77
        %p247 = pneg %p74
        %p248 = scmp.lt.s32.totalorder %s20, 1
        %s249 = scalar_select %p248, %s20, 1
        %p250 = scmp.lt.s32.totalorder %s21, 2
        %s251 = scalar_select %p250, %s21, 2
        %s252 = smul.addr %s249, 3
        %s253 = sadd.s32 %s251, %s252
        %s254 = scalar_lea.vmem %s2, %s253
        %p255 = pneg %p105
        %p256 = pneg %p102
        %p257 = pneg %p133
        %p258 = pneg %p130
        %s259 = sand.u32 %s120, 1
        %s260 = sand.u32 %s120, 1
        %s261 = smul.addr %s260, 64
        %s262 = scalar_lea.vmem [#allocation2], %s261
        %p263 = pneg %p161
        %p264 = pneg %p158
        %p265 = scmp.lt.s32.totalorder %s20, 1
        %s266 = scalar_select %p265, %s20, 1
        %p267 = scmp.lt.s32.totalorder %s21, 2
        %s268 = scalar_select %p267, %s21, 2
        %s269 = smul.addr %s266, 3
        %s270 = sadd.s32 %s268, %s269
        %s271 = scalar_lea.vmem %s4, %s270
        %p272 = scmp.lt.s32.totalorder %s20, 1
        %s273 = scalar_select %p272, %s20, 1
        %s274 = smul.addr %s273, 4
        %s275 = smul.addr %s274, 4
        %s276 = scalar_lea.vmem %s0, %s275
        %s277 = smul.u32 16, %s21
        %s278 = ssub.s32 38, %s277
        %p279 = scmp.lt.s32.totalorder %s278, 16
        %s280 = scalar_select %p279, %s278, 16
        %s281 = smul.u32 8, %s280
        %p282 = scmp.lt.s32.totalorder %s20, 1
        %s283 = scalar_select %p282, %s20, 1
        %p284 = scmp.lt.s32.totalorder %s277, 37
        %s285 = scalar_select %p284, %s277, 37
        %s286 = smul.addr %s283, 38
        %s287 = sadd.s32 %s285, %s286
        %s288 = smul.addr %s287, 8
        %s289 = scalar_lea.vmem %s1, %s288
        %s290 = smul.u32 16, %s21
        %s291 = ssub.s32 38, %s290
        %p292 = scmp.lt.s32.totalorder %s291, 16
        %s293 = scalar_select %p292, %s291, 16
        %s294 = smul.u32 8, %s293
        %p295 = scmp.lt.s32.totalorder %s20, 1
        %s296 = scalar_select %p295, %s20, 1
        %p297 = scmp.lt.s32.totalorder %s21, 2
        %s298 = scalar_select %p297, %s21, 2
        %s299 = smul.addr %s296, 3
        %s300 = sadd.s32 %s298, %s299
        %s301 = scalar_lea.vmem %s2, %s300
        %s302 = smul.u32 16, %s21
        %s303 = ssub.s32 38, %s302
        %p304 = scmp.lt.s32.totalorder %s303, 16
        %s305 = scalar_select %p304, %s303, 16
        %s306 = smul.u32 4, %s305
        %p307 = scmp.lt.s32.totalorder %s20, 1
        %s308 = scalar_select %p307, %s20, 1
        %p309 = scmp.lt.s32.totalorder %s21, 2
        %s310 = scalar_select %p309, %s21, 2
        %s311 = smul.addr %s308, 3
        %s312 = sadd.s32 %s310, %s311
        %s313 = scalar_lea.vmem %s4, %s312
        %v315 = vld [vmem:[%s289] sm:$0xff]
        %v316 = vld [vmem:[%s289 + $0x8] sm:$0xff]
        %v317 = vld [vmem:[%s289 + $0x10] sm:$0xff]
        %v318 = vld [vmem:[%s289 + $0x18] sm:$0xff]
        %v319 = vld [vmem:[%s289 + $0x20] sm:$0xff]
        %v320 = vld [vmem:[%s289 + $0x28] sm:$0xff]
        %v321 = vld [vmem:[%s289 + $0x30] sm:$0xff]
        %v322 = vld [vmem:[%s289 + $0x38] sm:$0xff]
        %v323 = vld [vmem:[%s289 + $0x40] sm:$0xff]
        %v324 = vld [vmem:[%s289 + $0x48] sm:$0xff]
        %v325 = vld [vmem:[%s289 + $0x50] sm:$0xff]
        %v326 = vld [vmem:[%s289 + $0x58] sm:$0xff]
        %v327 = vld [vmem:[%s289 + $0x60] sm:$0xff]
        %v328 = vld [vmem:[%s289 + $0x68] sm:$0xff]
        %v329 = vld [vmem:[%s289 + $0x70] sm:$0xff]
        %v330 = vld [vmem:[%s289 + $0x78] sm:$0xff]
        %v331 = vmul.f32 %v315, %v315
        %v332 = vmul.f32 %v316, %v316
        %v333 = vmul.f32 %v317, %v317
        %v334 = vmul.f32 %v318, %v318
        %v335 = vmul.f32 %v319, %v319
        %v336 = vmul.f32 %v320, %v320
        %v337 = vmul.f32 %v321, %v321
        %v338 = vmul.f32 %v322, %v322
        %v339 = vmul.f32 %v323, %v323
        %v340 = vmul.f32 %v324, %v324
        %v341 = vmul.f32 %v325, %v325
        %v342 = vmul.f32 %v326, %v326
        %v343 = vmul.f32 %v327, %v327
        %v344 = vmul.f32 %v328, %v328
        %v345 = vmul.f32 %v329, %v329
        %v346 = vmul.f32 %v330, %v330
        %v347 = vpack.c.bf16 %v332, %v331
        %v348 = vpack.c.bf16 %v334, %v333
        %v349 = vpack.c.bf16 %v336, %v335
        %v350 = vpack.c.bf16 %v338, %v337
        %v351 = vpack.c.bf16 %v340, %v339
        %v352 = vpack.c.bf16 %v342, %v341
        %v353 = vpack.c.bf16 %v344, %v343
        %v354 = vpack.c.bf16 %v346, %v345
        %v355 = vld [vmem:[%s276] sm:$0xf]
        %v356 = vld [vmem:[%s276 + $0x4] sm:$0xf]
        %v357 = vld [vmem:[%s276 + $0x8] sm:$0xf]
        %v358 = vld [vmem:[%s276 + $0xc] sm:$0xf]
        %v363 = vunpack.c.l.b16 %v355
        %v364 = vunpack.c.l.b16 %v356
        %v365 = vunpack.c.l.b16 %v357
        %v366 = vunpack.c.l.b16 %v358
        %v367 = vpack.c.b16 %v364, %v363
        %v368 = vpack.c.b16 %v366, %v365
        %vm371 = vcmask 261120
        %v373 = vsel %vm371, %v347, 0
        %v376 = vsel %vm371, %v348, 0
        %v379 = vsel %vm371, %v349, 0
        %v382 = vsel %vm371, %v350, 0
        %v385 = vsel %vm371, %v351, 0
        %v388 = vsel %vm371, %v352, 0
        %v391 = vsel %vm371, %v353, 0
        %v394 = vsel %vm371, %v354, 0
        %396 = vmatpush.bf16.msra.mxu0 0
        %397 = vmatpush.bf16.msra.mxu0 0
        %398 = vmatpush.bf16.msra.mxu0 0
        %399 = vmatpush.bf16.msra.mxu0 0
        %400 = vmatpush.bf16.msra.mxu0 0
        %401 = vmatpush.bf16.msra.mxu0 0
        %402 = vmatpush.bf16.msra.mxu0 %v368
        %403 = vmatpush.bf16.msra.mxu0 %v367
        %404 = vmatmul.bf16.gmra.mxu0 %v373
        %v405 = vpop.f32.mrf.mxu0
        %v406 = vadd.f32 0.0, %v405
        %v407 = vpop.f32.mrf.mxu0
        %v408 = vadd.f32 0.0, %v407
        %409 = vmatmul.bf16.gmra.mxu0 %v376
        %v410 = vpop.f32.mrf.mxu0
        %v411 = vadd.f32 0.0, %v410
        %v412 = vpop.f32.mrf.mxu0
        %v413 = vadd.f32 0.0, %v412
        %414 = vmatmul.bf16.gmra.mxu0 %v379
        %v415 = vpop.f32.mrf.mxu0
        %v416 = vadd.f32 0.0, %v415
        %v417 = vpop.f32.mrf.mxu0
        %v418 = vadd.f32 0.0, %v417
        %419 = vmatmul.bf16.gmra.mxu0 %v382
        %v420 = vpop.f32.mrf.mxu0
        %v421 = vadd.f32 0.0, %v420
        %v422 = vpop.f32.mrf.mxu0
        %v423 = vadd.f32 0.0, %v422
        %424 = vmatmul.bf16.gmra.mxu0 %v385
        %v425 = vpop.f32.mrf.mxu0
        %v426 = vadd.f32 0.0, %v425
        %v427 = vpop.f32.mrf.mxu0
        %v428 = vadd.f32 0.0, %v427
        %429 = vmatmul.bf16.gmra.mxu0 %v388
        %v430 = vpop.f32.mrf.mxu0
        %v431 = vadd.f32 0.0, %v430
        %v432 = vpop.f32.mrf.mxu0
        %v433 = vadd.f32 0.0, %v432
        %434 = vmatmul.bf16.gmra.mxu0 %v391
        %v435 = vpop.f32.mrf.mxu0
        %v436 = vadd.f32 0.0, %v435
        %v437 = vpop.f32.mrf.mxu0
        %v438 = vadd.f32 0.0, %v437
        %439 = vmatmul.bf16.gmra.mxu0 %v394
        %v440 = vpop.f32.mrf.mxu0
        %v441 = vadd.f32 0.0, %v440
        %v442 = vpop.f32.mrf.mxu0
        %v443 = vadd.f32 0.0, %v442
        %444 = vdwg.mxu0
        %v445 = vpack.c.bf16 %v406, %v406
        %v446 = vpack.c.bf16 %v408, %v408
        %v447 = vpack.c.bf16 %v411, %v411
        %v448 = vpack.c.bf16 %v413, %v413
        %v449 = vpack.c.bf16 %v416, %v416
        %v450 = vpack.c.bf16 %v418, %v418
        %v451 = vpack.c.bf16 %v421, %v421
        %v452 = vpack.c.bf16 %v423, %v423
        %v453 = vpack.c.bf16 %v426, %v426
        %v454 = vpack.c.bf16 %v428, %v428
        %v455 = vpack.c.bf16 %v431, %v431
        %v456 = vpack.c.bf16 %v433, %v433
        %v457 = vpack.c.bf16 %v436, %v436
        %v458 = vpack.c.bf16 %v438, %v438
        %v459 = vpack.c.bf16 %v441, %v441
        %v460 = vpack.c.bf16 %v443, %v443
        %461 = vst [vmem:[%s262] sm:$0xf] %v445
        %462 = vst [vmem:[%s262 + $0x4] sm:$0xf] %v446
        %463 = vst [vmem:[%s262 + $0x8] sm:$0xf] %v447
        %464 = vst [vmem:[%s262 + $0xc] sm:$0xf] %v448
        %465 = vst [vmem:[%s262 + $0x10] sm:$0xf] %v449
        %466 = vst [vmem:[%s262 + $0x14] sm:$0xf] %v450
        %467 = vst [vmem:[%s262 + $0x18] sm:$0xf] %v451
        %468 = vst [vmem:[%s262 + $0x1c] sm:$0xf] %v452
        %469 = vst [vmem:[%s262 + $0x20] sm:$0xf] %v453
        %470 = vst [vmem:[%s262 + $0x24] sm:$0xf] %v454
        %471 = vst [vmem:[%s262 + $0x28] sm:$0xf] %v455
        %472 = vst [vmem:[%s262 + $0x2c] sm:$0xf] %v456
        %473 = vst [vmem:[%s262 + $0x30] sm:$0xf] %v457
        %474 = vst [vmem:[%s262 + $0x34] sm:$0xf] %v458
        %475 = vst [vmem:[%s262 + $0x38] sm:$0xf] %v459
        %476 = vst [vmem:[%s262 + $0x3c] sm:$0xf] %v460
        %v477 = vld [vmem:[%s301] sm:$0x1]
        %v478 = vmul.f32 %v406, %v406
        %v479 = vmul.f32 %v408, %v408
        %v480 = vmul.f32 %v411, %v411
        %v481 = vmul.f32 %v413, %v413
        %v482 = vmul.f32 %v416, %v416
        %v483 = vmul.f32 %v418, %v418
        %v484 = vmul.f32 %v421, %v421
        %v485 = vmul.f32 %v423, %v423
        %v486 = vmul.f32 %v426, %v426
        %v487 = vmul.f32 %v428, %v428
        %v488 = vmul.f32 %v431, %v431
        %v489 = vmul.f32 %v433, %v433
        %v490 = vmul.f32 %v436, %v436
        %v491 = vmul.f32 %v438, %v438
        %v492 = vmul.f32 %v441, %v441
        %v493 = vmul.f32 %v443, %v443
        %s494 = smul.u32 %s21, 128
        %v495 = vlaneseq
        %v496 = vshrl.u32 %v495, 7
        %v497 = vadd.s32 %v496, 8
        %v498 = vadd.s32 %v496, 16
        %v499 = vadd.s32 %v496, 24
        %v500 = vadd.s32 %v496, 32
        %v501 = vadd.s32 %v496, 40
        %v502 = vadd.s32 %v496, 48
        %v503 = vadd.s32 %v496, 56
        %v504 = vadd.s32 %v496, 64
        %v505 = vadd.s32 %v496, 72
        %v506 = vadd.s32 %v496, 80
        %v507 = vadd.s32 %v496, 88
        %v508 = vadd.s32 %v496, 96
        %v509 = vadd.s32 %v496, 104
        %v510 = vadd.s32 %v496, 112
        %v511 = vadd.s32 %v496, 120
        %v512 = vstv %s494
        %v513 = vadd.s32 %v512, %v496
        %v514 = vadd.s32 %v512, %v497
        %v515 = vadd.s32 %v512, %v498
        %v516 = vadd.s32 %v512, %v499
        %v517 = vadd.s32 %v512, %v500
        %v518 = vadd.s32 %v512, %v501
        %v519 = vadd.s32 %v512, %v502
        %v520 = vadd.s32 %v512, %v503
        %v521 = vadd.s32 %v512, %v504
        %v522 = vadd.s32 %v512, %v505
        %v523 = vadd.s32 %v512, %v506
        %v524 = vadd.s32 %v512, %v507
        %v525 = vadd.s32 %v512, %v508
        %v526 = vadd.s32 %v512, %v509
        %v527 = vadd.s32 %v512, %v510
        %v528 = vadd.s32 %v512, %v511
        %vm529 = vcmp.lt.s32.totalorder %v513, 300
        %vm530 = vcmp.lt.s32.totalorder %v514, 300
        %vm531 = vcmp.lt.s32.totalorder %v515, 300
        %vm532 = vcmp.lt.s32.totalorder %v516, 300
        %vm533 = vcmp.lt.s32.totalorder %v517, 300
        %vm534 = vcmp.lt.s32.totalorder %v518, 300
        %vm535 = vcmp.lt.s32.totalorder %v519, 300
        %vm536 = vcmp.lt.s32.totalorder %v520, 300
        %vm537 = vcmp.lt.s32.totalorder %v521, 300
        %vm538 = vcmp.lt.s32.totalorder %v522, 300
        %vm539 = vcmp.lt.s32.totalorder %v523, 300
        %vm540 = vcmp.lt.s32.totalorder %v524, 300
        %vm541 = vcmp.lt.s32.totalorder %v525, 300
        %vm542 = vcmp.lt.s32.totalorder %v526, 300
        %vm543 = vcmp.lt.s32.totalorder %v527, 300
        %vm544 = vcmp.lt.s32.totalorder %v528, 300
        %v545 = vsel %vm529, 1, 0
        %v546 = vsel %vm530, 1, 0
        %v547 = vsel %vm531, 1, 0
        %v548 = vsel %vm532, 1, 0
        %v549 = vsel %vm533, 1, 0
        %v550 = vsel %vm534, 1, 0
        %v551 = vsel %vm535, 1, 0
        %v552 = vsel %vm536, 1, 0
        %v553 = vsel %vm537, 1, 0
        %v554 = vsel %vm538, 1, 0
        %v555 = vsel %vm539, 1, 0
        %v556 = vsel %vm540, 1, 0
        %v557 = vsel %vm541, 1, 0
        %v558 = vsel %vm542, 1, 0
        %v559 = vsel %vm543, 1, 0
        %v560 = vsel %vm544, 1, 0
        %vm561 = vcmp.eq.s32.totalorder %v545, 1
        %vm562 = vcmp.eq.s32.totalorder %v546, 1
        %vm563 = vcmp.eq.s32.totalorder %v547, 1
        %vm564 = vcmp.eq.s32.totalorder %v548, 1
        %vm565 = vcmp.eq.s32.totalorder %v549, 1
        %vm566 = vcmp.eq.s32.totalorder %v550, 1
        %vm567 = vcmp.eq.s32.totalorder %v551, 1
        %vm568 = vcmp.eq.s32.totalorder %v552, 1
        %vm569 = vcmp.eq.s32.totalorder %v553, 1
        %vm570 = vcmp.eq.s32.totalorder %v554, 1
        %vm571 = vcmp.eq.s32.totalorder %v555, 1
        %vm572 = vcmp.eq.s32.totalorder %v556, 1
        %vm573 = vcmp.eq.s32.totalorder %v557, 1
        %vm574 = vcmp.eq.s32.totalorder %v558, 1
        %vm575 = vcmp.eq.s32.totalorder %v559, 1
        %vm576 = vcmp.eq.s32.totalorder %v560, 1
        %v577 = vsel %vm561, %v478, 0.0
        %v578 = vsel %vm562, %v479, 0.0
        %v579 = vsel %vm563, %v480, 0.0
        %v580 = vsel %vm564, %v481, 0.0
        %v581 = vsel %vm565, %v482, 0.0
        %v582 = vsel %vm566, %v483, 0.0
        %v583 = vsel %vm567, %v484, 0.0
        %v584 = vsel %vm568, %v485, 0.0
        %v585 = vsel %vm569, %v486, 0.0
        %v586 = vsel %vm570, %v487, 0.0
        %v587 = vsel %vm571, %v488, 0.0
        %v588 = vsel %vm572, %v489, 0.0
        %v589 = vsel %vm573, %v490, 0.0
        %v590 = vsel %vm574, %v491, 0.0
        %v591 = vsel %vm575, %v492, 0.0
        %v592 = vsel %vm576, %v493, 0.0
        %v593 = vlaneseq
        %v594 = vand.u32 %v593, 127
        %v595 = vadd.s32 %v512, %v594
        %vm596 = vcmp.lt.s32.totalorder %v595, 300
        %v597 = vsel %vm596, %v477, 0.0
        %598 = vmatpush.msra.mxu0 %v592
        %599 = vmatpush.msra.mxu0 %v591
        %600 = vmatpush.msra.mxu0 %v590
        %601 = vmatpush.msra.mxu0 %v589
        %602 = vmatpush.msra.mxu0 %v588
        %603 = vmatpush.msra.mxu0 %v587
        %604 = vmatpush.msra.mxu0 %v586
        %605 = vmatpush.msra.mxu0 %v585
        %606 = vmatpush.msra.mxu0 %v584
        %607 = vmatpush.msra.mxu0 %v583
        %608 = vmatpush.msra.mxu0 %v582
        %609 = vmatpush.msra.mxu0 %v581
        %610 = vmatpush.msra.mxu0 %v580
        %611 = vmatpush.msra.mxu0 %v579
        %612 = vmatpush.msra.mxu0 %v578
        %613 = vmatpush.msra.mxu0 %v577
        %614 = vmatmul.f32.gmra.mxu0 %v597
        %v615 = vpop.f32.mrf.mxu0
        %v616 = vadd.f32 0.0, %v615
        %617 = vdwg.mxu0
        %618 = vst [vmem:[%s313] sm:$0x1] %v616
        %s619 = sand.u32 %s120, 1
        %s620 = sand.u32 %s120, 1
        %s621 = smul.addr %s620, 64
        %s622 = scalar_lea.vmem [#allocation2], %s621
        %p623 = scmp.lt.s32.totalorder %s20, 1
        %s624 = scalar_select %p623, %s20, 1
        %p625 = scmp.lt.s32.totalorder %s21, 2
        %s626 = scalar_select %p625, %s21, 2
        %s627 = smul.addr %s624, 3
        %s628 = sadd.s32 %s626, %s627
        %s629 = scalar_lea.vmem %s4, %s628
        // Predicated region
        $region33: #{wks_vectorized_forward.2} parent=31 // pred_check
          %p630 = pneg %p130
        $region34: #{wks_vectorized_forward.2} parent=31 // pred_check_branch
          %632 = sbr.rel (%p630) target = $region36
        $region35: #{wks_vectorized_forward.2} parent=31 // pred_region
          %s633 = smul.u32 16, %s21
          %s634 = ssub.s32 38, %s633
          %p635 = scmp.lt.s32.totalorder %s634, 16
          %s636 = scalar_select %p635, %s634, 16
          %s637 = smul.u32 4, %s636
          %p638 = scmp.ne.s32.totalorder 0, %s637
          %s639 = smul.addr %s20, 38
          %s640 = sadd.s32 %s633, %s639
          %s641 = smul.addr %s640, 4
          %s642 = scalar_lea.vmem %s3, %s641
          // Predicated region
          $region37: #{wks_vectorized_forward.2} parent=35 // pred_check
            %p643 = pneg %p638
          $region38: #{wks_vectorized_forward.2} parent=35 // pred_check_branch
            %645 = sbr.rel (%p643) target = $region40
          $region39: #{wks_vectorized_forward.2} parent=35 // pred_region
            // Predicated region
            $region41: #{wks_vectorized_forward.2} parent=39 // pred_check
              _
            $region42: #{wks_vectorized_forward.2} parent=39 // pred_check_branch
              %647 = sbr.rel target = $region44
            $region43: #{wks_vectorized_forward.2} parent=39 // pred_region
              // Predicated region
              $region63: #{wks_vectorized_forward.2} parent=43 // pred_check
                _
              $region64: #{wks_vectorized_forward.2} parent=43 // pred_check_branch
                %727 = sbr.rel (0) target = $region66
              $region65: #{wks_vectorized_forward.2} parent=43 // pred_region
                %s729 = ssub.s32 16, 1
                %s730 = sshrl.u32 %s636, 4
                // While loop
                $region67: #{wks_vectorized_forward.2} parent=65 // loop_pre_header
                  _
                $region68: #{wks_vectorized_forward.2} parent=65 // loop_header
                  %s732 = sphi 0, %s734
                  %p733 = scmp.ge.s32.totalorder %s732, %s730
                  %s737 = sphi 0, %s774
                  %s738 = sphi %s622, %s777
                  %s739 = sphi %s642, %s778
                $region69: #{wks_vectorized_forward.2} parent=65 // loop_header_branch
                  %736 = sbr.rel (%p733) target = $region73
                $region70: #{wks_vectorized_forward.2} parent=65 // loop_body
                  %v740 = vld [vmem:[%s738] sm:%s729]
                  %741 = vst [vmem:[%s739] sm:%s729] %v740
                  %v742 = vld [vmem:[%s738 + $0x4] sm:%s729]
                  %743 = vst [vmem:[%s739 + $0x4] sm:%s729] %v742
                  %v744 = vld [vmem:[%s738 + $0x8] sm:%s729]
                  %745 = vst [vmem:[%s739 + $0x8] sm:%s729] %v744
                  %v746 = vld [vmem:[%s738 + $0xc] sm:%s729]
                  %747 = vst [vmem:[%s739 + $0xc] sm:%s729] %v746
                  %v748 = vld [vmem:[%s738 + $0x10] sm:%s729]
                  %749 = vst [vmem:[%s739 + $0x10] sm:%s729] %v748
                  %v750 = vld [vmem:[%s738 + $0x14] sm:%s729]
                  %751 = vst [vmem:[%s739 + $0x14] sm:%s729] %v750
                  %v752 = vld [vmem:[%s738 + $0x18] sm:%s729]
                  %753 = vst [vmem:[%s739 + $0x18] sm:%s729] %v752
                  %v754 = vld [vmem:[%s738 + $0x1c] sm:%s729]
                  %755 = vst [vmem:[%s739 + $0x1c] sm:%s729] %v754
                  %v756 = vld [vmem:[%s738 + $0x20] sm:%s729]
                  %757 = vst [vmem:[%s739 + $0x20] sm:%s729] %v756
                  %v758 = vld [vmem:[%s738 + $0x24] sm:%s729]
                  %759 = vst [vmem:[%s739 + $0x24] sm:%s729] %v758
                  %v760 = vld [vmem:[%s738 + $0x28] sm:%s729]
                  %761 = vst [vmem:[%s739 + $0x28] sm:%s729] %v760
                  %v762 = vld [vmem:[%s738 + $0x2c] sm:%s729]
                  %763 = vst [vmem:[%s739 + $0x2c] sm:%s729] %v762
                  %v764 = vld [vmem:[%s738 + $0x30] sm:%s729]
                  %765 = vst [vmem:[%s739 + $0x30] sm:%s729] %v764
                  %v766 = vld [vmem:[%s738 + $0x34] sm:%s729]
                  %767 = vst [vmem:[%s739 + $0x34] sm:%s729] %v766
                  %v768 = vld [vmem:[%s738 + $0x38] sm:%s729]
                  %769 = vst [vmem:[%s739 + $0x38] sm:%s729] %v768
                  %v770 = vld [vmem:[%s738 + $0x3c] sm:%s729]
                  %771 = vst [vmem:[%s739 + $0x3c] sm:%s729] %v770
                  %s772 = sadd.s32 1, %s737
                  %p773 = scmp.ge.s32.totalorder %s772, %s730
                  %s774 = scalar_select %p773, 0, %s772
                  %s775 = smul.u32 %s774, 64
                  %s776 = smul.u32 %s774, 64
                  %s777 = scalar_lea.vmem %s622, %s775 [#allocation2]
                  %s778 = scalar_lea.vmem %s642, %s776
                $region71: #{wks_vectorized_forward.2} parent=65 // loop_footer
                  %s734 = sadd.s32 %s732, 1
                $region72: #{wks_vectorized_forward.2} parent=65 // loop_footer_branch
                  %731 = sbr.rel target = $region68
                $region73: #{wks_vectorized_forward.2} parent=65 // loop_exit
                  _
                %s779 = sshrl.u32 %s636, 4
                %s780 = sand.u32 %s636, 15
                %s781 = smul.u32 %s779, 16
                %s782 = smul.u32 4, %s781
                %s783 = scalar_lea.vmem %s622, %s782 [#allocation2]
                %s784 = smul.u32 4, %s781
                %s785 = scalar_lea.vmem %s642, %s784
                // While loop
                $region74: #{wks_vectorized_forward.2} parent=65 // loop_pre_header
                  _
                $region75: #{wks_vectorized_forward.2} parent=65 // loop_header
                  %s787 = sphi 0, %s789
                  %p788 = scmp.ge.s32.totalorder %s787, %s780
                  %s792 = sphi 0, %s799
                  %s793 = sphi %s783, %s802
                  %s794 = sphi %s785, %s803
                $region76: #{wks_vectorized_forward.2} parent=65 // loop_header_branch
                  %791 = sbr.rel (%p788) target = $region80
                $region77: #{wks_vectorized_forward.2} parent=65 // loop_body
                  %v795 = vld [vmem:[%s793] sm:%s729]
                  %796 = vst [vmem:[%s794] sm:%s729] %v795
                  %s797 = sadd.s32 1, %s792
                  %p798 = scmp.ge.s32.totalorder %s797, %s780
                  %s799 = scalar_select %p798, 0, %s797
                  %s800 = smul.u32 %s799, 4
                  %s801 = smul.u32 %s799, 4
                  %s802 = scalar_lea.vmem %s783, %s800 [#allocation2]
                  %s803 = scalar_lea.vmem %s785, %s801
                $region78: #{wks_vectorized_forward.2} parent=65 // loop_footer
                  %s789 = sadd.s32 %s787, 1
                $region79: #{wks_vectorized_forward.2} parent=65 // loop_footer_branch
                  %786 = sbr.rel target = $region75
                $region80: #{wks_vectorized_forward.2} parent=65 // loop_exit
                  _
              $region66: #{wks_vectorized_forward.2} parent=43 // pred_fallthru
                _
            $region44: #{wks_vectorized_forward.2} parent=39 // pred_fallthru
              _
            // Predicated region
            $region45: #{wks_vectorized_forward.2} parent=39 // pred_check
              _
            $region46: #{wks_vectorized_forward.2} parent=39 // pred_check_branch
              %649 = sbr.rel (0) target = $region48
            $region47: #{wks_vectorized_forward.2} parent=39 // pred_region
              %s651 = ssub.s32 16, 1
              %s652 = sshrl.u32 %s636, 4
              // While loop
              $region49: #{wks_vectorized_forward.2} parent=47 // loop_pre_header
                _
              $region50: #{wks_vectorized_forward.2} parent=47 // loop_header
                %s654 = sphi 0, %s656
                %p655 = scmp.ge.s32.totalorder %s654, %s652
                %s659 = sphi 0, %s696
                %s660 = sphi %s622, %s699
                %s661 = sphi %s642, %s700
              $region51: #{wks_vectorized_forward.2} parent=47 // loop_header_branch
                %658 = sbr.rel (%p655) target = $region55
              $region52: #{wks_vectorized_forward.2} parent=47 // loop_body
                %v662 = vld [vmem:[%s660] sm:%s651]
                %663 = vst [vmem:[%s661] sm:%s651] %v662
                %v664 = vld [vmem:[%s660 + $0x4] sm:%s651]
                %665 = vst [vmem:[%s661 + $0x4] sm:%s651] %v664
                %v666 = vld [vmem:[%s660 + $0x8] sm:%s651]
                %667 = vst [vmem:[%s661 + $0x8] sm:%s651] %v666
                %v668 = vld [vmem:[%s660 + $0xc] sm:%s651]
                %669 = vst [vmem:[%s661 + $0xc] sm:%s651] %v668
                %v670 = vld [vmem:[%s660 + $0x10] sm:%s651]
                %671 = vst [vmem:[%s661 + $0x10] sm:%s651] %v670
                %v672 = vld [vmem:[%s660 + $0x14] sm:%s651]
                %673 = vst [vmem:[%s661 + $0x14] sm:%s651] %v672
                %v674 = vld [vmem:[%s660 + $0x18] sm:%s651]
                %675 = vst [vmem:[%s661 + $0x18] sm:%s651] %v674
                %v676 = vld [vmem:[%s660 + $0x1c] sm:%s651]
                %677 = vst [vmem:[%s661 + $0x1c] sm:%s651] %v676
                %v678 = vld [vmem:[%s660 + $0x20] sm:%s651]
                %679 = vst [vmem:[%s661 + $0x20] sm:%s651] %v678
                %v680 = vld [vmem:[%s660 + $0x24] sm:%s651]
                %681 = vst [vmem:[%s661 + $0x24] sm:%s651] %v680
                %v682 = vld [vmem:[%s660 + $0x28] sm:%s651]
                %683 = vst [vmem:[%s661 + $0x28] sm:%s651] %v682
                %v684 = vld [vmem:[%s660 + $0x2c] sm:%s651]
                %685 = vst [vmem:[%s661 + $0x2c] sm:%s651] %v684
                %v686 = vld [vmem:[%s660 + $0x30] sm:%s651]
                %687 = vst [vmem:[%s661 + $0x30] sm:%s651] %v686
                %v688 = vld [vmem:[%s660 + $0x34] sm:%s651]
                %689 = vst [vmem:[%s661 + $0x34] sm:%s651] %v688
                %v690 = vld [vmem:[%s660 + $0x38] sm:%s651]
                %691 = vst [vmem:[%s661 + $0x38] sm:%s651] %v690
                %v692 = vld [vmem:[%s660 + $0x3c] sm:%s651]
                %693 = vst [vmem:[%s661 + $0x3c] sm:%s651] %v692
                %s694 = sadd.s32 1, %s659
                %p695 = scmp.ge.s32.totalorder %s694, %s652
                %s696 = scalar_select %p695, 0, %s694
                %s697 = smul.u32 %s696, 64
                %s698 = smul.u32 %s696, 64
                %s699 = scalar_lea.vmem %s622, %s697 [#allocation2]
                %s700 = scalar_lea.vmem %s642, %s698
              $region53: #{wks_vectorized_forward.2} parent=47 // loop_footer
                %s656 = sadd.s32 %s654, 1
              $region54: #{wks_vectorized_forward.2} parent=47 // loop_footer_branch
                %653 = sbr.rel target = $region50
              $region55: #{wks_vectorized_forward.2} parent=47 // loop_exit
                _
              %s701 = sshrl.u32 %s636, 4
              %s702 = sand.u32 %s636, 15
              %s703 = smul.u32 %s701, 16
              %s704 = smul.u32 4, %s703
              %s705 = scalar_lea.vmem %s622, %s704 [#allocation2]
              %s706 = smul.u32 4, %s703
              %s707 = scalar_lea.vmem %s642, %s706
              // While loop
              $region56: #{wks_vectorized_forward.2} parent=47 // loop_pre_header
                _
              $region57: #{wks_vectorized_forward.2} parent=47 // loop_header
                %s709 = sphi 0, %s711
                %p710 = scmp.ge.s32.totalorder %s709, %s702
                %s714 = sphi 0, %s721
                %s715 = sphi %s705, %s724
                %s716 = sphi %s707, %s725
              $region58: #{wks_vectorized_forward.2} parent=47 // loop_header_branch
                %713 = sbr.rel (%p710) target = $region62
              $region59: #{wks_vectorized_forward.2} parent=47 // loop_body
                %v717 = vld [vmem:[%s715] sm:%s651]
                %718 = vst [vmem:[%s716] sm:%s651] %v717
                %s719 = sadd.s32 1, %s714
                %p720 = scmp.ge.s32.totalorder %s719, %s702
                %s721 = scalar_select %p720, 0, %s719
                %s722 = smul.u32 %s721, 4
                %s723 = smul.u32 %s721, 4
                %s724 = scalar_lea.vmem %s705, %s722 [#allocation2]
                %s725 = scalar_lea.vmem %s707, %s723
              $region60: #{wks_vectorized_forward.2} parent=47 // loop_footer
                %s711 = sadd.s32 %s709, 1
              $region61: #{wks_vectorized_forward.2} parent=47 // loop_footer_branch
                %708 = sbr.rel target = $region57
              $region62: #{wks_vectorized_forward.2} parent=47 // loop_exit
                _
            $region48: #{wks_vectorized_forward.2} parent=39 // pred_fallthru
              _
          $region40: #{wks_vectorized_forward.2} parent=35 // pred_fallthru
            _
          %804 = vnop
        $region36: #{wks_vectorized_forward.2} parent=31 // pred_fallthru
          _
        // Predicated region
        $region81: #{wks_vectorized_forward.2} parent=31 // pred_check
          %p805 = pneg %p158
        $region82: #{wks_vectorized_forward.2} parent=31 // pred_check_branch
          %807 = sbr.rel (%p805) target = $region84
        $region83: #{wks_vectorized_forward.2} parent=31 // pred_region
          _
        $region84: #{wks_vectorized_forward.2} parent=31 // pred_fallthru
          _
      $region32: #{wks_vectorized_forward.2} parent=5 // pred_fallthru
        _
      %p808 = scmp.le.s32.totalorder 2, %s11
      // Predicated region
      $region85: #{wks_vectorized_forward.2} parent=5 // pred_check
        %p809 = pneg %p808
      $region86: #{wks_vectorized_forward.2} parent=5 // pred_check_branch
        %811 = sbr.rel (%p809) target = $region88
      $region87: #{wks_vectorized_forward.2} parent=5 // pred_region
        %s812 = ssub.s32 %s11, 2
        // Predicated region
        $region89: #{wks_vectorized_forward.2} parent=87 // pred_check
          %p813 = pneg %p136
        $region90: #{wks_vectorized_forward.2} parent=87 // pred_check_branch
          %815 = sbr.rel (%p813) target = $region92
        $region91: #{wks_vectorized_forward.2} parent=87 // pred_region
          %s816 = sand.u32 %s121, 1
          %s817 = sand.u32 %s121, 1
          %s818 = smul.addr %s817, 64
          %s819 = scalar_lea.vmem [#allocation2], %s818
        $region92: #{wks_vectorized_forward.2} parent=87 // pred_fallthru
          _
        // Predicated region
        $region93: #{wks_vectorized_forward.2} parent=87 // pred_check
          %p820 = pneg %p164
        $region94: #{wks_vectorized_forward.2} parent=87 // pred_check_branch
          %822 = sbr.rel (%p820) target = $region96
        $region95: #{wks_vectorized_forward.2} parent=87 // pred_region
          %p823 = scmp.lt.s32.totalorder %s22, 1
          %s824 = scalar_select %p823, %s22, 1
          %p825 = scmp.lt.s32.totalorder %s23, 2
          %s826 = scalar_select %p825, %s23, 2
          %s827 = smul.addr %s824, 3
          %s828 = sadd.s32 %s826, %s827
          %s829 = scalar_lea.vmem %s4, %s828
        $region96: #{wks_vectorized_forward.2} parent=87 // pred_fallthru
          _
      $region88: #{wks_vectorized_forward.2} parent=5 // pred_fallthru
        _
    $region6: #{wks_vectorized_forward.2} parent=1 // loop_footer
      %s15 = sadd.s32 1, %s11
    $region7: #{wks_vectorized_forward.2} parent=1 // loop_footer_branch
      %10 = sbr.rel target = $region3
    $region8: #{wks_vectorized_forward.2} parent=1 // loop_exit
      _

</llo_original>
